<compile_context>
chip_gen: v5e
topology: v5e:2x2
jax: 0.10.0
libtpu: 0.0.40
codegen_flags: <defaults>
</compile_context>

<pallas_src>
import functools

import jax
import jax.numpy as jnp
from jax.experimental import pallas as pl
from jax.experimental.pallas import tpu as pltpu

BN_EPS = 1e-5
LANE = 128          # lane-dense padded channel dimension
STATS_ROWS = 8      # sublane-padded rows per tile in the stats output (row0=S, row1=Q)


def _round_up(x, m):
    return ((x + m - 1) // m) * m


# ---------------------------------------------------------------------------
# Per-generation sizing
# ---------------------------------------------------------------------------
def _vmem_budget_bytes():
    """Scoped-VMEM budget: ~60% of physical VMEM, capped (v5e/v6e: ~77 MiB of
    128 MiB; v7x: ~38 MiB of 64 MiB).  Falls back to the v7x-safe value."""
    cap = 64 * 1024 * 1024
    try:
        info = pltpu.get_tpu_info()
        cap = int(getattr(info, "vmem_capacity_bytes", cap)) or cap
    except Exception:
        pass
    return min(int(cap * 0.6), 96 * 1024 * 1024)


def _pick_tile_m(m, pass_kns, vmem_budget):
    """Pick the largest M tile whose double-buffered working set fits the budget.
    pass_kns: list of passes; each pass is a list of (K, Cp) GEMMs sharing it."""
    t_best = 2048
    for kns in pass_kns:
        fixed = sum(2 * k * cp * 2 for k, cp in kns)        # dbl-buffered bf16 weights
        per_row = sum(4 * k + 12 * cp for k, cp in kns)     # patches + stash + f32 work
        t = max(vmem_budget - fixed - (2 << 20), 0) // max(per_row, 1)
        t_best = min(t_best, t)
    t_best = min(t_best, _round_up(m, 8))
    return max(8, (int(t_best) // 8) * 8)


# ---------------------------------------------------------------------------
# Pass A: conv GEMM -> bf16 stash + per-tile centered partial stats
# ---------------------------------------------------------------------------
def _gemm_stats_kernel(*refs, n_convs, tile_m):
    # refs = (p_0, w_0, ..., p_{n-1}, w_{n-1}, y_0, st_0, ..., y_{n-1}, st_{n-1})
    n = n_convs
    for c in range(n):
        p_ref, w_ref = refs[2 * c], refs[2 * c + 1]
        y_ref, st_ref = refs[2 * n + 2 * c], refs[2 * n + 2 * c + 1]

        y = jnp.dot(p_ref[...], w_ref[...], preferred_element_type=jnp.float32)
        s = jnp.sum(y, axis=0, keepdims=True)                 # (1, Cp) tile sum
        ctr = s / float(tile_m)                               # per-tile centering ref
        d = y - ctr
        q = jnp.sum(d * d, axis=0, keepdims=True)             # (1, Cp) centered sumsq
        pad = jnp.zeros((STATS_ROWS - 2, y.shape[1]), jnp.float32)
        st_ref[...] = jnp.concatenate([s, q, pad], axis=0)    # full (8, Cp) block store
        y_ref[...] = y.astype(y_ref.dtype)                    # bf16 pre-BN stash


def _conv_gemm_stats(pairs, tile_m, vmem_limit):
    """pairs: [(patches (Mpad,K) bf16, weights (K,Cp) bf16), ...]
    Returns [(y_raw (Mpad,Cp) bf16, stats (Mtiles*8, Cp) f32), ...]."""
    n = len(pairs)
    mpad = pairs[0][0].shape[0]
    cp = pairs[0][1].shape[1]
    ntiles = mpad // tile_m

    args, in_specs, out_shape, out_specs = [], [], [], []
    flops, bytes_rw = 0, 0
    for p, w in pairs:
        k = p.shape[1]
        args += [p, w]
        in_specs += [pl.BlockSpec((tile_m, k), lambda i: (i, 0)),
                     pl.BlockSpec((k, cp), lambda i: (0, 0))]
        out_shape += [jax.ShapeDtypeStruct((mpad, cp), jnp.bfloat16),
                      jax.ShapeDtypeStruct((ntiles * STATS_ROWS, cp), jnp.float32)]
        out_specs += [pl.BlockSpec((tile_m, cp), lambda i: (i, 0)),
                      pl.BlockSpec((STATS_ROWS, cp), lambda i: (i, 0))]
        flops += 2 * mpad * k * cp
        bytes_rw += (p.size * p.dtype.itemsize + w.size * w.dtype.itemsize
                     + mpad * cp * 2 + ntiles * STATS_ROWS * cp * 4)

    outs = pl.pallas_call(
        functools.partial(_gemm_stats_kernel, n_convs=n, tile_m=tile_m),
        out_shape=tuple(out_shape),
        grid=(ntiles,),
        in_specs=in_specs,
        out_specs=tuple(out_specs),
        compiler_params=pltpu.CompilerParams(
            dimension_semantics=("parallel",),        # no accumulator -> fully parallel
            vmem_limit_bytes=vmem_limit),
        cost_estimate=pl.CostEstimate(flops=flops, transcendentals=0,
                                      bytes_accessed=bytes_rw),
    )(*args)
    return [(outs[2 * c], outs[2 * c + 1]) for c in range(n)]


def _bn_affine(stats, m_true, mpad, tile_m, gamma_p, beta_p):
    """Merge per-tile centered partial stats into a training-mode BN affine
    (biased variance, matching PyTorch's training forward).  Zero-padded rows
    (only in the last tile) are corrected exactly."""
    cp = stats.shape[1]
    ntiles = stats.shape[0] // STATS_ROWS
    st = stats.reshape(ntiles, STATS_ROWS, cp)
    s, q = st[:, 0, :], st[:, 1, :]                           # (ntiles, Cp)
    ctr = s / float(tile_m)                                   # same op as in-kernel

    n_pad_last = mpad - m_true
    n_real = jnp.asarray([float(tile_m)] * (ntiles - 1)
                         + [float(tile_m - n_pad_last)], jnp.float32)[:, None]
    n_pad = float(tile_m) - n_real

    mean = jnp.sum(s, axis=0) / float(m_true)
    d = ctr - mean[None, :]
    css = (q - n_pad * ctr * ctr) + 2.0 * d * (s - n_real * ctr) + n_real * d * d
    var = jnp.maximum(jnp.sum(css, axis=0) / float(m_true), 0.0)

    scale = gamma_p * jax.lax.rsqrt(var + BN_EPS)
    shift = beta_p - mean * scale
    return scale[None, :].astype(jnp.float32), shift[None, :].astype(jnp.float32)


# ---------------------------------------------------------------------------
# Pass B: elementwise affine (+ residual) (+ ReLU) over the bf16 stash
# ---------------------------------------------------------------------------
def _affine(y_ref, sc_ref, sh_ref):
    return y_ref[...].astype(jnp.float32) * sc_ref[...] + sh_ref[...]


def _apply_kernel(y_ref, sc_ref, sh_ref, o_ref, *, apply_act):
    v = _affine(y_ref, sc_ref, sh_ref)
    if apply_act:
        v = jnp.maximum(v, 0.0)
    o_ref[...] = v.astype(o_ref.dtype)


def _apply_res_tensor_kernel(y_ref, sc_ref, sh_ref, r_ref, o_ref, *, apply_act):
    v = _affine(y_ref, sc_ref, sh_ref) + r_ref[...].astype(jnp.float32)
    if apply_act:
        v = jnp.maximum(v, 0.0)
    o_ref[...] = v.astype(o_ref.dtype)


def _apply_res_affine_kernel(y_ref, sc_ref, sh_ref, yd_ref, scd_ref, shd_ref,
                             o_ref, *, apply_act):
    # conv2+bn2 with the 1x1-downsample conv + its BN fused as a second affine.
    v = _affine(y_ref, sc_ref, sh_ref) + _affine(yd_ref, scd_ref, shd_ref)
    if apply_act:
        v = jnp.maximum(v, 0.0)
    o_ref[...] = v.astype(o_ref.dtype)


def _bn_apply(y_raw, scale, shift, tile_m, vmem_limit, *, apply_act, out_dtype,
              res_tensor=None, res_affine=None):
    mpad, cp = y_raw.shape
    ntiles = mpad // tile_m
    tile_spec = pl.BlockSpec((tile_m, cp), lambda i: (i, 0))
    vec_spec = pl.BlockSpec((1, cp), lambda i: (0, 0))

    args = [y_raw, scale, shift]
    in_specs = [tile_spec, vec_spec, vec_spec]
    bytes_rw = (y_raw.size * 2 + 2 * cp * 4
                + mpad * cp * jnp.dtype(out_dtype).itemsize)

    if res_affine is not None:
        yd, scd, shd = res_affine
        args += [yd, scd, shd]
        in_specs += [tile_spec, vec_spec, vec_spec]
        bytes_rw += yd.size * 2 + 2 * cp * 4
        kern = functools.partial(_apply_res_affine_kernel, apply_act=apply_act)
    elif res_tensor is not None:
        args.append(res_tensor)
        in_specs.append(tile_spec)
        bytes_rw += res_tensor.size * res_tensor.dtype.itemsize
        kern = functools.partial(_apply_res_tensor_kernel, apply_act=apply_act)
    else:
        kern = functools.partial(_apply_kernel, apply_act=apply_act)

    return pl.pallas_call(
        kern,
        out_shape=jax.ShapeDtypeStruct((mpad, cp), out_dtype),
        grid=(ntiles,),
        in_specs=in_specs,
        out_specs=tile_spec,
        compiler_params=pltpu.CompilerParams(
            dimension_semantics=("parallel",),
            vmem_limit_bytes=vmem_limit),
        cost_estimate=pl.CostEstimate(flops=4 * mpad * cp, transcendentals=0,
                                      bytes_accessed=bytes_rw),
    )(*args)


# ---------------------------------------------------------------------------
# Plain-JAX glue: im2col patch extraction and padding helpers
# ---------------------------------------------------------------------------
def _im2col_3x3(x_nhwc, stride):
    # TODO(synk): move im2col into pass A as 9 shifted accumulating matmuls over
    # a halo'ed NHWC tile to remove the ~9x HBM patch materialization.
    n, h, w, c = x_nhwc.shape
    xp = jnp.pad(x_nhwc, ((0, 0), (1, 1), (1, 1), (0, 0)))
    ho = (h - 1) // stride + 1
    wo = (w - 1) // stride + 1
    cols = []
    for kh in range(3):
        for kw in range(3):
            cols.append(xp[:, kh:kh + (ho - 1) * stride + 1:stride,
                              kw:kw + (wo - 1) * stride + 1:stride, :])
    p = jnp.stack(cols, axis=3)                        # (N, Ho, Wo, 9, C)
    return p.reshape(n * ho * wo, 9 * c), (ho, wo)


def _pad_cout(w2d, cp):
    return jnp.pad(w2d, ((0, 0), (0, cp - w2d.shape[1])))


def _pad_vec(v, cp):
    return jnp.pad(v, (0, cp - v.shape[0]))


def _pad_rows(a, mpad):
    return jnp.pad(a, ((0, mpad - a.shape[0]), (0, 0)))


# ---------------------------------------------------------------------------
# BasicResBlock forward (training-mode BN, ReLU activation)
# ---------------------------------------------------------------------------
def basic_res_block_forward(x, params, *, stride, has_downsample,
                            tile_m=None, io_nchw=True):
    """io_nchw=True accepts/returns NCHW (PyTorch layout); pass False to consume
    and produce NHWC and skip the two layout transposes around the block."""
    if io_nchw:
        x = jnp.transpose(x, (0, 2, 3, 1))             # NCHW -> NHWC
    x = x.astype(jnp.float32)
    n, h, w, cin = x.shape
    cout = params["w1"].shape[3]
    if not has_downsample:
        assert stride == 1 and cin == cout, \
            "identity skip path requires stride==1 and Cin==Cout"

    cp = _round_up(cout, LANE)                         # lane-dense padded channels
    x_bf = x.astype(jnp.bfloat16)                      # single bf16 cast of the input

    p1, (ho, wo) = _im2col_3x3(x_bf, stride)
    m = n * ho * wo

    # Per-generation tile / VMEM sizing.
    pass_kns = [[(9 * cin, cp)] + ([(cin, cp)] if has_downsample else []),
                [(9 * cout, cp)]]
    vmem_limit = _vmem_budget_bytes()
    if tile_m is None:
        tile_m = _pick_tile_m(m, pass_kns, vmem_limit)
    tile_m = max(8, (int(tile_m) // 8) * 8)
    mpad = _round_up(m, tile_m)

    p1 = _pad_rows(p1, mpad)
    w1 = _pad_cout(params["w1"].reshape(9 * cin, cout), cp).astype(jnp.bfloat16)
    g1, be1 = _pad_vec(params["g1"], cp), _pad_vec(params["be1"], cp)
    # NOTE: conv biases (b1/b2/bd) are dropped: training-mode BN's mean
    # subtraction cancels a per-channel bias exactly.

    # ---- pass A #1: conv1 GEMM (+ 1x1 downsample GEMM riding along) ----------
    if has_downsample:
        pd = _pad_rows(x_bf[:, ::stride, ::stride, :].reshape(m, cin), mpad)
        wd = _pad_cout(params["wd"].reshape(cin, cout), cp).astype(jnp.bfloat16)
        gd, bed = _pad_vec(params["gd"], cp), _pad_vec(params["bed"], cp)
        (y1_raw, st1), (yd_raw, st_d) = _conv_gemm_stats(
            [(p1, w1), (pd, wd)], tile_m, vmem_limit)
        scd, shd = _bn_affine(st_d, m, mpad, tile_m, gd, bed)
    else:
        ((y1_raw, st1),) = _conv_gemm_stats([(p1, w1)], tile_m, vmem_limit)
    sc1, sh1 = _bn_affine(st1, m, mpad, tile_m, g1, be1)

    # ---- pass B #1: y1 = relu(bn1(conv1(x)))  (bf16, feeds conv2 patches) ----
    y1 = _bn_apply(y1_raw, sc1, sh1, tile_m, vmem_limit,
                   apply_act=True, out_dtype=jnp.bfloat16)
    y1 = y1[:m, :cout].reshape(n, ho, wo, cout)

    # ---- pass A #2: conv2 (3x3, stride 1) GEMM + stats ------------------------
    p2, _ = _im2col_3x3(y1, 1)
    p2 = _pad_rows(p2, mpad).astype(jnp.bfloat16)
    w2 = _pad_cout(params["w2"].reshape(9 * cout, cout), cp).astype(jnp.bfloat16)
    g2, be2 = _pad_vec(params["g2"], cp), _pad_vec(params["be2"], cp)
    ((y2_raw, st2),) = _conv_gemm_stats([(p2, w2)], tile_m, vmem_limit)
    sc2, sh2 = _bn_affine(st2, m, mpad, tile_m, g2, be2)

    # ---- pass B #2: out = relu(bn2(conv2(y1)) + identity) ---------------------
    if has_downsample:
        out = _bn_apply(y2_raw, sc2, sh2, tile_m, vmem_limit, apply_act=True,
                        out_dtype=jnp.float32, res_affine=(yd_raw, scd, shd))
    else:
        res = _pad_rows(jnp.pad(x_bf.reshape(m, cin), ((0, 0), (0, cp - cin))), mpad)
        out = _bn_apply(y2_raw, sc2, sh2, tile_m, vmem_limit, apply_act=True,
                        out_dtype=jnp.float32, res_tensor=res)

    out = out[:m, :cout].reshape(n, ho, wo, cout)
    if io_nchw:
        out = jnp.transpose(out, (0, 3, 1, 2))         # NHWC -> NCHW
    return out


# ---------------------------------------------------------------------------
# Pure-JAX reference (same bf16-GEMM precision path) for the sanity check
# ---------------------------------------------------------------------------
def _ref_forward(x_nchw, params, *, stride, has_downsample):
    x = jnp.transpose(x_nchw, (0, 2, 3, 1)).astype(jnp.float32)

    def conv(inp, w, b, s, pad):
        y = jax.lax.conv_general_dilated(
            inp.astype(jnp.bfloat16), w.astype(jnp.bfloat16), (s, s), pad,
            dimension_numbers=("NHWC", "HWIO", "NHWC"),
            preferred_element_type=jnp.float32)
        return y + b

    def bn(y, g, be):
        mu = jnp.mean(y, axis=(0, 1, 2), keepdims=True)
        v = jnp.mean((y - mu) ** 2, axis=(0, 1, 2), keepdims=True)
        return (y - mu) * jax.lax.rsqrt(v + BN_EPS) * g + be

    y = jnp.maximum(bn(conv(x, params["w1"], params["b1"], stride, ((1, 1), (1, 1))),
                       params["g1"], params["be1"]), 0.0)
    if has_downsample:
        identity = bn(conv(x, params["wd"], params["bd"], stride, ((0, 0), (0, 0))),
                      params["gd"], params["bed"])
    else:
        identity = x
    y = bn(conv(y, params["w2"], params["b2"], 1, ((1, 1), (1, 1))),
           params["g2"], params["be2"]) + identity
    return jnp.transpose(jnp.maximum(y, 0.0), (0, 3, 1, 2))


def init_params(key, cin, cout):
    ks = jax.random.split(key, 12)
    nrm = lambda k, shp: 0.1 * jax.random.normal(k, shp, jnp.float32)
    return {
        "w1": nrm(ks[0], (3, 3, cin, cout)), "b1": nrm(ks[1], (cout,)),
        "g1": 1.0 + nrm(ks[2], (cout,)), "be1": nrm(ks[3], (cout,)),
        "w2": nrm(ks[4], (3, 3, cout, cout)), "b2": nrm(ks[5], (cout,)),
        "g2": 1.0 + nrm(ks[6], (cout,)), "be2": nrm(ks[7], (cout,)),
        "wd": nrm(ks[8], (1, 1, cin, cout)), "bd": nrm(ks[9], (cout,)),
        "gd": 1.0 + nrm(ks[10], (cout,)), "bed": nrm(ks[11], (cout,)),
    }


if __name__ == "__main__":
    key = jax.random.PRNGKey(0)
    kx1, kp1, kx2, kp2 = jax.random.split(key, 4)

    fwd = jax.jit(basic_res_block_forward,
                  static_argnames=("stride", "has_downsample", "tile_m", "io_nchw"))

    # Case 1: BasicResBlock(4, 8, nn.ReLU, stride=2, is_first_block=True) — downsample path.
    x1 = jax.random.normal(kx1, (2, 4, 16, 16), jnp.float32)      # NCHW
    params1 = init_params(kp1, 4, 8)
    out1 = fwd(x1, params1, stride=2, has_downsample=True,
               tile_m=64)   # small explicit tile -> multi-step grid even at toy shapes
    out1 = jax.block_until_ready(out1)
    ref1 = _ref_forward(x1, params1, stride=2, has_downsample=True)
    assert out1.shape == (2, 8, 8, 8), out1.shape
    err1 = float(jnp.max(jnp.abs(out1 - ref1)))
    assert jnp.allclose(out1, ref1, atol=3e-2, rtol=3e-2), err1

    # Case 2: BasicResBlock(8, 8, nn.ReLU, stride=1) — identity skip path (auto tile_m).
    x2 = jax.random.normal(kx2, (2, 8, 16, 16), jnp.float32)
    params2 = init_params(kp2, 8, 8)
    out2 = fwd(x2, params2, stride=1, has_downsample=False)
    out2 = jax.block_until_ready(out2)
    ref2 = _ref_forward(x2, params2, stride=1, has_downsample=False)
    assert out2.shape == (2, 8, 16, 16), out2.shape
    err2 = float(jnp.max(jnp.abs(out2 - ref2)))
    assert jnp.allclose(out2, ref2, atol=3e-2, rtol=3e-2), err2

    print("KERNEL_OK")
</pallas_src>

<mosaic_0001>
module attributes {stable_mosaic.version = 11 : i64} {
  func.func @_gemm_stats_kernel(%arg0: i32, %arg1: memref<64x36xbf16, #tpu.memory_space<vmem>>, %arg2: memref<36x128xbf16, #tpu.memory_space<vmem>>, %arg3: memref<64x4xbf16, #tpu.memory_space<vmem>>, %arg4: memref<4x128xbf16, #tpu.memory_space<vmem>>, %arg5: memref<64x128xbf16, #tpu.memory_space<vmem>>, %arg6: memref<8x128xf32, #tpu.memory_space<vmem>>, %arg7: memref<64x128xbf16, #tpu.memory_space<vmem>>, %arg8: memref<8x128xf32, #tpu.memory_space<vmem>>) attributes {dimension_semantics = [#tpu.dimension_semantics<parallel>], iteration_bounds = array<i64: 2>, scalar_prefetch = 0 : i64, scratch_operands = 0 : i64, tpu.core_type = #tpu.core_type<tc>, window_params = [{transform_indices = @transform_0, window_bounds = array<i64: 64, 36>}, {pipeline_mode = #tpu.pipeline_mode<synchronous>, transform_indices = @transform_1, window_bounds = array<i64: 36, 128>}, {transform_indices = @transform_2, window_bounds = array<i64: 64, 4>}, {pipeline_mode = #tpu.pipeline_mode<synchronous>, transform_indices = @transform_3, window_bounds = array<i64: 4, 128>}, {transform_indices = @transform_4, window_bounds = array<i64: 64, 128>}, {transform_indices = @transform_5, window_bounds = array<i64: 8, 128>}, {transform_indices = @transform_6, window_bounds = array<i64: 64, 128>}, {transform_indices = @transform_7, window_bounds = array<i64: 8, 128>}]} {
    %c0 = arith.constant 0 : index
    %c0_0 = arith.constant 0 : index
    %0 = vector.load %arg1[%c0, %c0_0] : memref<64x36xbf16, #tpu.memory_space<vmem>>, vector<64x36xbf16>
    %c0_1 = arith.constant 0 : index
    %c0_2 = arith.constant 0 : index
    %1 = vector.load %arg2[%c0_1, %c0_2] : memref<36x128xbf16, #tpu.memory_space<vmem>>, vector<36x128xbf16>
    %cst = arith.constant dense<0.000000e+00> : vector<64x128xf32>
    %2 = tpu.matmul %0, %1, %cst {dimension_numbers = #tpu.dot_dimension_numbers<[1], [0], [0], [1], [0, 0, 1, 1], [], []>} : vector<64x36xbf16>, vector<36x128xbf16>, vector<64x128xf32> -> vector<64x128xf32>
    %cst_3 = arith.constant dense<0.000000e+00> : vector<128xf32>
    %3 = vector.multi_reduction <add>, %2, %cst_3 [0] : vector<64x128xf32> to vector<128xf32>
    %4 = vector.shape_cast %3 : vector<128xf32> to vector<1x128xf32>
    %cst_4 = arith.constant 6.400000e+01 : f32
    %5 = vector.broadcast %cst_4 : f32 to vector<1x128xf32>
    %6 = arith.divf %4, %5 : vector<1x128xf32>
    %7 = vector.broadcast %6 : vector<1x128xf32> to vector<64x128xf32>
    %8 = arith.subf %2, %7 : vector<64x128xf32>
    %9 = arith.mulf %8, %8 : vector<64x128xf32>
    %cst_5 = arith.constant dense<0.000000e+00> : vector<128xf32>
    %10 = vector.multi_reduction <add>, %9, %cst_5 [0] : vector<64x128xf32> to vector<128xf32>
    %11 = vector.shape_cast %10 : vector<128xf32> to vector<1x128xf32>
    %cst_6 = arith.constant 0.000000e+00 : f32
    %12 = vector.broadcast %cst_6 : f32 to vector<6x128xf32>
    %13 = tpu.concatenate %4, %11, %12 in 0 : vector<1x128xf32>, vector<1x128xf32>, vector<6x128xf32> -> vector<8x128xf32>
    %c0_7 = arith.constant 0 : index
    %c0_8 = arith.constant 0 : index
    %14 = vector.load %arg6[%c0_7, %c0_8] : memref<8x128xf32, #tpu.memory_space<vmem>>, vector<8x128xf32>
    tpu.vector_store %arg6[%c0_7, %c0_8], %13 {strides = array<i32>} : memref<8x128xf32, #tpu.memory_space<vmem>>, vector<8x128xf32>,
    %15 = arith.truncf %2 : vector<64x128xf32> to vector<64x128xbf16>
    %c0_9 = arith.constant 0 : index
    %c0_10 = arith.constant 0 : index
    %16 = vector.load %arg5[%c0_9, %c0_10] : memref<64x128xbf16, #tpu.memory_space<vmem>>, vector<64x128xbf16>
    tpu.vector_store %arg5[%c0_9, %c0_10], %15 {strides = array<i32>} : memref<64x128xbf16, #tpu.memory_space<vmem>>, vector<64x128xbf16>,
    %c0_11 = arith.constant 0 : index
    %c0_12 = arith.constant 0 : index
    %17 = vector.load %arg3[%c0_11, %c0_12] : memref<64x4xbf16, #tpu.memory_space<vmem>>, vector<64x4xbf16>
    %c0_13 = arith.constant 0 : index
    %c0_14 = arith.constant 0 : index
    %18 = vector.load %arg4[%c0_13, %c0_14] : memref<4x128xbf16, #tpu.memory_space<vmem>>, vector<4x128xbf16>
    %cst_15 = arith.constant dense<0.000000e+00> : vector<64x128xf32>
    %19 = tpu.matmul %17, %18, %cst_15 {dimension_numbers = #tpu.dot_dimension_numbers<[1], [0], [0], [1], [0, 0, 1, 1], [], []>} : vector<64x4xbf16>, vector<4x128xbf16>, vector<64x128xf32> -> vector<64x128xf32>
    %cst_16 = arith.constant dense<0.000000e+00> : vector<128xf32>
    %20 = vector.multi_reduction <add>, %19, %cst_16 [0] : vector<64x128xf32> to vector<128xf32>
    %21 = vector.shape_cast %20 : vector<128xf32> to vector<1x128xf32>
    %cst_17 = arith.constant 6.400000e+01 : f32
    %22 = vector.broadcast %cst_17 : f32 to vector<1x128xf32>
    %23 = arith.divf %21, %22 : vector<1x128xf32>
    %24 = vector.broadcast %23 : vector<1x128xf32> to vector<64x128xf32>
    %25 = arith.subf %19, %24 : vector<64x128xf32>
    %26 = arith.mulf %25, %25 : vector<64x128xf32>
    %cst_18 = arith.constant dense<0.000000e+00> : vector<128xf32>
    %27 = vector.multi_reduction <add>, %26, %cst_18 [0] : vector<64x128xf32> to vector<128xf32>
    %28 = vector.shape_cast %27 : vector<128xf32> to vector<1x128xf32>
    %cst_19 = arith.constant 0.000000e+00 : f32
    %29 = vector.broadcast %cst_19 : f32 to vector<6x128xf32>
    %30 = tpu.concatenate %21, %28, %29 in 0 : vector<1x128xf32>, vector<1x128xf32>, vector<6x128xf32> -> vector<8x128xf32>
    %c0_20 = arith.constant 0 : index
    %c0_21 = arith.constant 0 : index
    %31 = vector.load %arg8[%c0_20, %c0_21] : memref<8x128xf32, #tpu.memory_space<vmem>>, vector<8x128xf32>
    tpu.vector_store %arg8[%c0_20, %c0_21], %30 {strides = array<i32>} : memref<8x128xf32, #tpu.memory_space<vmem>>, vector<8x128xf32>,
    %32 = arith.truncf %19 : vector<64x128xf32> to vector<64x128xbf16>
    %c0_22 = arith.constant 0 : index
    %c0_23 = arith.constant 0 : index
    %33 = vector.load %arg7[%c0_22, %c0_23] : memref<64x128xbf16, #tpu.memory_space<vmem>>, vector<64x128xbf16>
    tpu.vector_store %arg7[%c0_22, %c0_23], %32 {strides = array<i32>} : memref<64x128xbf16, #tpu.memory_space<vmem>>, vector<64x128xbf16>,
    return
  }
  func.func @transform_0(%arg0: i32) -> (i32, i32) {
    %c0_i32 = arith.constant 0 : i32
    %c0_i32_0 = arith.constant 0 : i32
    return %arg0, %c0_i32 : i32, i32
  }
  func.func @transform_1(%arg0: i32) -> (i32, i32) {
    %c0_i32 = arith.constant 0 : i32
    %c0_i32_0 = arith.constant 0 : i32
    %c0_i32_1 = arith.constant 0 : i32
    return %c0_i32, %c0_i32_0 : i32, i32
  }
  func.func @transform_2(%arg0: i32) -> (i32, i32) {
    %c0_i32 = arith.constant 0 : i32
    %c0_i32_0 = arith.constant 0 : i32
    return %arg0, %c0_i32 : i32, i32
  }
  func.func @transform_3(%arg0: i32) -> (i32, i32) {
    %c0_i32 = arith.constant 0 : i32
    %c0_i32_0 = arith.constant 0 : i32
    %c0_i32_1 = arith.constant 0 : i32
    return %c0_i32, %c0_i32_0 : i32, i32
  }
  func.func @transform_4(%arg0: i32) -> (i32, i32) {
    %c0_i32 = arith.constant 0 : i32
    %c0_i32_0 = arith.constant 0 : i32
    return %arg0, %c0_i32 : i32, i32
  }
  func.func @transform_5(%arg0: i32) -> (i32, i32) {
    %c0_i32 = arith.constant 0 : i32
    %c0_i32_0 = arith.constant 0 : i32
    return %arg0, %c0_i32 : i32, i32
  }
  func.func @transform_6(%arg0: i32) -> (i32, i32) {
    %c0_i32 = arith.constant 0 : i32
    %c0_i32_0 = arith.constant 0 : i32
    return %arg0, %c0_i32 : i32, i32
  }
  func.func @transform_7(%arg0: i32) -> (i32, i32) {
    %c0_i32 = arith.constant 0 : i32
    %c0_i32_0 = arith.constant 0 : i32
    return %arg0, %c0_i32 : i32, i32
  }
}

module attributes {stable_mosaic.version = 11 : i64} {
  func.func @_apply_kernel(%arg0: i32, %arg1: memref<64x128xbf16, #tpu.memory_space<vmem>>, %arg2: memref<1x128xf32, #tpu.memory_space<vmem>>, %arg3: memref<1x128xf32, #tpu.memory_space<vmem>>, %arg4: memref<64x128xbf16, #tpu.memory_space<vmem>>) attributes {dimension_semantics = [#tpu.dimension_semantics<parallel>], iteration_bounds = array<i64: 2>, scalar_prefetch = 0 : i64, scratch_operands = 0 : i64, tpu.core_type = #tpu.core_type<tc>, window_params = [{transform_indices = @transform_0, window_bounds = array<i64: 64, 128>}, {pipeline_mode = #tpu.pipeline_mode<synchronous>, transform_indices = @transform_1, window_bounds = array<i64: 1, 128>}, {pipeline_mode = #tpu.pipeline_mode<synchronous>, transform_indices = @transform_2, window_bounds = array<i64: 1, 128>}, {transform_indices = @transform_3, window_bounds = array<i64: 64, 128>}]} {
    %c0 = arith.constant 0 : index
    %c0_0 = arith.constant 0 : index
    %0 = vector.load %arg1[%c0, %c0_0] : memref<64x128xbf16, #tpu.memory_space<vmem>>, vector<64x128xbf16>
    %1 = arith.extf %0 : vector<64x128xbf16> to vector<64x128xf32>
    %c0_1 = arith.constant 0 : index
    %c0_2 = arith.constant 0 : index
    %2 = vector.load %arg2[%c0_1, %c0_2] : memref<1x128xf32, #tpu.memory_space<vmem>>, vector<1x128xf32>
    %3 = vector.broadcast %2 : vector<1x128xf32> to vector<64x128xf32>
    %4 = arith.mulf %1, %3 : vector<64x128xf32>
    %c0_3 = arith.constant 0 : index
    %c0_4 = arith.constant 0 : index
    %5 = vector.load %arg3[%c0_3, %c0_4] : memref<1x128xf32, #tpu.memory_space<vmem>>, vector<1x128xf32>
    %6 = vector.broadcast %5 : vector<1x128xf32> to vector<64x128xf32>
    %7 = arith.addf %4, %6 : vector<64x128xf32>
    %cst = arith.constant 0.000000e+00 : f32
    %8 = vector.broadcast %cst : f32 to vector<64x128xf32>
    %9 = arith.maximumf %7, %8 : vector<64x128xf32>
    %10 = arith.truncf %9 : vector<64x128xf32> to vector<64x128xbf16>
    %c0_5 = arith.constant 0 : index
    %c0_6 = arith.constant 0 : index
    %11 = vector.load %arg4[%c0_5, %c0_6] : memref<64x128xbf16, #tpu.memory_space<vmem>>, vector<64x128xbf16>
    tpu.vector_store %arg4[%c0_5, %c0_6], %10 {strides = array<i32>} : memref<64x128xbf16, #tpu.memory_space<vmem>>, vector<64x128xbf16>,
    return
  }
  func.func @transform_0(%arg0: i32) -> (i32, i32) {
    %c0_i32 = arith.constant 0 : i32
    %c0_i32_0 = arith.constant 0 : i32
    return %arg0, %c0_i32 : i32, i32
  }
  func.func @transform_1(%arg0: i32) -> (i32, i32) {
    %c0_i32 = arith.constant 0 : i32
    %c0_i32_0 = arith.constant 0 : i32
    %c0_i32_1 = arith.constant 0 : i32
    return %c0_i32, %c0_i32_0 : i32, i32
  }
  func.func @transform_2(%arg0: i32) -> (i32, i32) {
    %c0_i32 = arith.constant 0 : i32
    %c0_i32_0 = arith.constant 0 : i32
    %c0_i32_1 = arith.constant 0 : i32
    return %c0_i32, %c0_i32_0 : i32, i32
  }
  func.func @transform_3(%arg0: i32) -> (i32, i32) {
    %c0_i32 = arith.constant 0 : i32
    %c0_i32_0 = arith.constant 0 : i32
    return %arg0, %c0_i32 : i32, i32
  }
}

module attributes {stable_mosaic.version = 11 : i64} {
  func.func @_gemm_stats_kernel(%arg0: i32, %arg1: memref<64x72xbf16, #tpu.memory_space<vmem>>, %arg2: memref<72x128xbf16, #tpu.memory_space<vmem>>, %arg3: memref<64x128xbf16, #tpu.memory_space<vmem>>, %arg4: memref<8x128xf32, #tpu.memory_space<vmem>>) attributes {dimension_semantics = [#tpu.dimension_semantics<parallel>], iteration_bounds = array<i64: 2>, scalar_prefetch = 0 : i64, scratch_operands = 0 : i64, tpu.core_type = #tpu.core_type<tc>, window_params = [{transform_indices = @transform_0, window_bounds = array<i64: 64, 72>}, {pipeline_mode = #tpu.pipeline_mode<synchronous>, transform_indices = @transform_1, window_bounds = array<i64: 72, 128>}, {transform_indices = @transform_2, window_bounds = array<i64: 64, 128>}, {transform_indices = @transform_3, window_bounds = array<i64: 8, 128>}]} {
    %c0 = arith.constant 0 : index
    %c0_0 = arith.constant 0 : index
    %0 = vector.load %arg1[%c0, %c0_0] : memref<64x72xbf16, #tpu.memory_space<vmem>>, vector<64x72xbf16>
    %c0_1 = arith.constant 0 : index
    %c0_2 = arith.constant 0 : index
    %1 = vector.load %arg2[%c0_1, %c0_2] : memref<72x128xbf16, #tpu.memory_space<vmem>>, vector<72x128xbf16>
    %cst = arith.constant dense<0.000000e+00> : vector<64x128xf32>
    %2 = tpu.matmul %0, %1, %cst {dimension_numbers = #tpu.dot_dimension_numbers<[1], [0], [0], [1], [0, 0, 1, 1], [], []>} : vector<64x72xbf16>, vector<72x128xbf16>, vector<64x128xf32> -> vector<64x128xf32>
    %cst_3 = arith.constant dense<0.000000e+00> : vector<128xf32>
    %3 = vector.multi_reduction <add>, %2, %cst_3 [0] : vector<64x128xf32> to vector<128xf32>
    %4 = vector.shape_cast %3 : vector<128xf32> to vector<1x128xf32>
    %cst_4 = arith.constant 6.400000e+01 : f32
    %5 = vector.broadcast %cst_4 : f32 to vector<1x128xf32>
    %6 = arith.divf %4, %5 : vector<1x128xf32>
    %7 = vector.broadcast %6 : vector<1x128xf32> to vector<64x128xf32>
    %8 = arith.subf %2, %7 : vector<64x128xf32>
    %9 = arith.mulf %8, %8 : vector<64x128xf32>
    %cst_5 = arith.constant dense<0.000000e+00> : vector<128xf32>
    %10 = vector.multi_reduction <add>, %9, %cst_5 [0] : vector<64x128xf32> to vector<128xf32>
    %11 = vector.shape_cast %10 : vector<128xf32> to vector<1x128xf32>
    %cst_6 = arith.constant 0.000000e+00 : f32
    %12 = vector.broadcast %cst_6 : f32 to vector<6x128xf32>
    %13 = tpu.concatenate %4, %11, %12 in 0 : vector<1x128xf32>, vector<1x128xf32>, vector<6x128xf32> -> vector<8x128xf32>
    %c0_7 = arith.constant 0 : index
    %c0_8 = arith.constant 0 : index
    %14 = vector.load %arg4[%c0_7, %c0_8] : memref<8x128xf32, #tpu.memory_space<vmem>>, vector<8x128xf32>
    tpu.vector_store %arg4[%c0_7, %c0_8], %13 {strides = array<i32>} : memref<8x128xf32, #tpu.memory_space<vmem>>, vector<8x128xf32>,
    %15 = arith.truncf %2 : vector<64x128xf32> to vector<64x128xbf16>
    %c0_9 = arith.constant 0 : index
    %c0_10 = arith.constant 0 : index
    %16 = vector.load %arg3[%c0_9, %c0_10] : memref<64x128xbf16, #tpu.memory_space<vmem>>, vector<64x128xbf16>
    tpu.vector_store %arg3[%c0_9, %c0_10], %15 {strides = array<i32>} : memref<64x128xbf16, #tpu.memory_space<vmem>>, vector<64x128xbf16>,
    return
  }
  func.func @transform_0(%arg0: i32) -> (i32, i32) {
    %c0_i32 = arith.constant 0 : i32
    %c0_i32_0 = arith.constant 0 : i32
    return %arg0, %c0_i32 : i32, i32
  }
  func.func @transform_1(%arg0: i32) -> (i32, i32) {
    %c0_i32 = arith.constant 0 : i32
    %c0_i32_0 = arith.constant 0 : i32
    %c0_i32_1 = arith.constant 0 : i32
    return %c0_i32, %c0_i32_0 : i32, i32
  }
  func.func @transform_2(%arg0: i32) -> (i32, i32) {
    %c0_i32 = arith.constant 0 : i32
    %c0_i32_0 = arith.constant 0 : i32
    return %arg0, %c0_i32 : i32, i32
  }
  func.func @transform_3(%arg0: i32) -> (i32, i32) {
    %c0_i32 = arith.constant 0 : i32
    %c0_i32_0 = arith.constant 0 : i32
    return %arg0, %c0_i32 : i32, i32
  }
}

module attributes {stable_mosaic.version = 11 : i64} {
  func.func @_apply_res_affine_kernel(%arg0: i32, %arg1: memref<64x128xbf16, #tpu.memory_space<vmem>>, %arg2: memref<1x128xf32, #tpu.memory_space<vmem>>, %arg3: memref<1x128xf32, #tpu.memory_space<vmem>>, %arg4: memref<64x128xbf16, #tpu.memory_space<vmem>>, %arg5: memref<1x128xf32, #tpu.memory_space<vmem>>, %arg6: memref<1x128xf32, #tpu.memory_space<vmem>>, %arg7: memref<64x128xf32, #tpu.memory_space<vmem>>) attributes {dimension_semantics = [#tpu.dimension_semantics<parallel>], iteration_bounds = array<i64: 2>, scalar_prefetch = 0 : i64, scratch_operands = 0 : i64, tpu.core_type = #tpu.core_type<tc>, window_params = [{transform_indices = @transform_0, window_bounds = array<i64: 64, 128>}, {pipeline_mode = #tpu.pipeline_mode<synchronous>, transform_indices = @transform_1, window_bounds = array<i64: 1, 128>}, {pipeline_mode = #tpu.pipeline_mode<synchronous>, transform_indices = @transform_2, window_bounds = array<i64: 1, 128>}, {transform_indices = @transform_3, window_bounds = array<i64: 64, 128>}, {pipeline_mode = #tpu.pipeline_mode<synchronous>, transform_indices = @transform_4, window_bounds = array<i64: 1, 128>}, {pipeline_mode = #tpu.pipeline_mode<synchronous>, transform_indices = @transform_5, window_bounds = array<i64: 1, 128>}, {transform_indices = @transform_6, window_bounds = array<i64: 64, 128>}]} {
    %c0 = arith.constant 0 : index
    %c0_0 = arith.constant 0 : index
    %0 = vector.load %arg1[%c0, %c0_0] : memref<64x128xbf16, #tpu.memory_space<vmem>>, vector<64x128xbf16>
    %1 = arith.extf %0 : vector<64x128xbf16> to vector<64x128xf32>
    %c0_1 = arith.constant 0 : index
    %c0_2 = arith.constant 0 : index
    %2 = vector.load %arg2[%c0_1, %c0_2] : memref<1x128xf32, #tpu.memory_space<vmem>>, vector<1x128xf32>
    %3 = vector.broadcast %2 : vector<1x128xf32> to vector<64x128xf32>
    %4 = arith.mulf %1, %3 : vector<64x128xf32>
    %c0_3 = arith.constant 0 : index
    %c0_4 = arith.constant 0 : index
    %5 = vector.load %arg3[%c0_3, %c0_4] : memref<1x128xf32, #tpu.memory_space<vmem>>, vector<1x128xf32>
    %6 = vector.broadcast %5 : vector<1x128xf32> to vector<64x128xf32>
    %7 = arith.addf %4, %6 : vector<64x128xf32>
    %c0_5 = arith.constant 0 : index
    %c0_6 = arith.constant 0 : index
    %8 = vector.load %arg4[%c0_5, %c0_6] : memref<64x128xbf16, #tpu.memory_space<vmem>>, vector<64x128xbf16>
    %9 = arith.extf %8 : vector<64x128xbf16> to vector<64x128xf32>
    %c0_7 = arith.constant 0 : index
    %c0_8 = arith.constant 0 : index
    %10 = vector.load %arg5[%c0_7, %c0_8] : memref<1x128xf32, #tpu.memory_space<vmem>>, vector<1x128xf32>
    %11 = vector.broadcast %10 : vector<1x128xf32> to vector<64x128xf32>
    %12 = arith.mulf %9, %11 : vector<64x128xf32>
    %c0_9 = arith.constant 0 : index
    %c0_10 = arith.constant 0 : index
    %13 = vector.load %arg6[%c0_9, %c0_10] : memref<1x128xf32, #tpu.memory_space<vmem>>, vector<1x128xf32>
    %14 = vector.broadcast %13 : vector<1x128xf32> to vector<64x128xf32>
    %15 = arith.addf %12, %14 : vector<64x128xf32>
    %16 = arith.addf %7, %15 : vector<64x128xf32>
    %cst = arith.constant 0.000000e+00 : f32
    %17 = vector.broadcast %cst : f32 to vector<64x128xf32>
    %18 = arith.maximumf %16, %17 : vector<64x128xf32>
    %c0_11 = arith.constant 0 : index
    %c0_12 = arith.constant 0 : index
    %19 = vector.load %arg7[%c0_11, %c0_12] : memref<64x128xf32, #tpu.memory_space<vmem>>, vector<64x128xf32>
    tpu.vector_store %arg7[%c0_11, %c0_12], %18 {strides = array<i32>} : memref<64x128xf32, #tpu.memory_space<vmem>>, vector<64x128xf32>,
    return
  }
  func.func @transform_0(%arg0: i32) -> (i32, i32) {
    %c0_i32 = arith.constant 0 : i32
    %c0_i32_0 = arith.constant 0 : i32
    return %arg0, %c0_i32 : i32, i32
  }
  func.func @transform_1(%arg0: i32) -> (i32, i32) {
    %c0_i32 = arith.constant 0 : i32
    %c0_i32_0 = arith.constant 0 : i32
    %c0_i32_1 = arith.constant 0 : i32
    return %c0_i32, %c0_i32_0 : i32, i32
  }
  func.func @transform_2(%arg0: i32) -> (i32, i32) {
    %c0_i32 = arith.constant 0 : i32
    %c0_i32_0 = arith.constant 0 : i32
    %c0_i32_1 = arith.constant 0 : i32
    return %c0_i32, %c0_i32_0 : i32, i32
  }
  func.func @transform_3(%arg0: i32) -> (i32, i32) {
    %c0_i32 = arith.constant 0 : i32
    %c0_i32_0 = arith.constant 0 : i32
    return %arg0, %c0_i32 : i32, i32
  }
  func.func @transform_4(%arg0: i32) -> (i32, i32) {
    %c0_i32 = arith.constant 0 : i32
    %c0_i32_0 = arith.constant 0 : i32
    %c0_i32_1 = arith.constant 0 : i32
    return %c0_i32, %c0_i32_0 : i32, i32
  }
  func.func @transform_5(%arg0: i32) -> (i32, i32) {
    %c0_i32 = arith.constant 0 : i32
    %c0_i32_0 = arith.constant 0 : i32
    %c0_i32_1 = arith.constant 0 : i32
    return %c0_i32, %c0_i32_0 : i32, i32
  }
  func.func @transform_6(%arg0: i32) -> (i32, i32) {
    %c0_i32 = arith.constant 0 : i32
    %c0_i32_0 = arith.constant 0 : i32
    return %arg0, %c0_i32 : i32, i32
  }
}

</mosaic_0001>

<llo_original>
// kernel: basic_res_block_forward.5
$region0: #{basic_res_block_forward.5}
  #allocation0 [shape = 'u32[]', space=smem, size = 0x4, offset = 0x4, fixed_abs, tag = 'smem constant byte address 0x4 - core index']
  #allocation1 [shape = 'u32[72,128]{1,0:T(1,128)}', space=vmem, size = 0x9000, scoped, tag = 'internal scratch']
  %s0 = inlined_call_operand.vmem [shape: bf16[128,128], index: 0, kind: input, shape index: {}]
  %s1 = inlined_call_operand.vmem [shape: f32[1,128], index: 1, kind: input, shape index: {}]
  %s2 = inlined_call_operand.vmem [shape: f32[1,128], index: 2, kind: input, shape index: {}]
  %s3 = inlined_call_operand.vmem [shape: bf16[128,128], index: 3, kind: output, shape index: {}]
  %s4 = sld [smem:[#allocation0]]
  $region45: #{basic_res_block_forward.5} parent=0
    _
  %s6 = ssub.s32 1, %s4
  %s7 = scalar_select 0, %s6, %s4
  loop: start=0, step=1, limit=4
  $region2: #{basic_res_block_forward.5} parent=0 // loop_pre_header
    _
  $region3: #{basic_res_block_forward.5} parent=0 // loop_header
    %s9 = sphi 0, %s13
    %p10 = scmp.ge.s32.totalorder %s9, 4
    %s19 = sphi 0, %s21
    %s22 = sphi 0, %s19
    %s23 = sphi 0, %s22
    %s39 = sphi 0, %s23
    %s43 = sphi 0, %s43
    %s45 = sphi 0, %s43
    %s46 = sphi 0, %s45
    %s60 = sphi 0, %s46
    %s64 = sphi 0, %s64
    %s66 = sphi 0, %s64
    %s67 = sphi 0, %s66
    %s81 = sphi 0, %s67
    %s87 = sphi 0, %s89
    %s90 = sphi 0, %s87
    %s91 = sphi 0, %s90
    %s107 = sphi 0, %s91
  $region4: #{basic_res_block_forward.5} parent=0 // loop_header_branch
    %12 = sbr.rel (%p10) target = $region8
  $region5: #{basic_res_block_forward.5} parent=0 // loop_body
    %s14 = ssub.s32 %s9, 1
    %s15 = ssub.s32 %s9, 2
    %s16 = sadd.s32 %s9, 1
    %s17 = ssub.s32 %s9, %s16
    %p18 = scmp.eq.s32.totalorder %s17, 0
    %s20 = sadd.s32 %s19, 1
    %s21 = scalar_select %p18, %s19, %s20
    %p24 = pneg %p18
    %p25 = scmp.eq.s32.totalorder %s9, 1
    %p26 = por %p24, %p25
    %p27 = scmp.ne.s32.totalorder %s19, %s22
    %p28 = scmp.eq.s32.totalorder %s9, 0
    %p29 = por %p27, %p28
    %p30 = scmp.ne.s32.totalorder %s19, %s22
    %p31 = scmp.eq.s32.totalorder %s14, 1
    %p32 = por %p30, %p31
    %p33 = scmp.ne.s32.totalorder %s22, %s23
    %p34 = scmp.eq.s32.totalorder %s14, 0
    %p35 = por %p33, %p34
    %p36 = scmp.ne.s32.totalorder %s22, %s23
    %p37 = scmp.eq.s32.totalorder %s15, 1
    %p38 = por %p36, %p37
    %p40 = scmp.ne.s32.totalorder %s23, %s39
    %p41 = scmp.eq.s32.totalorder %s15, 0
    %p42 = por %p40, %p41
    %s44 = sadd.s32 %s43, 1
    %p47 = scmp.eq.s32.totalorder %s9, 1
    %p48 = scmp.ne.s32.totalorder %s43, %s45
    %p49 = scmp.eq.s32.totalorder %s9, 0
    %p50 = por %p48, %p49
    %p51 = scmp.ne.s32.totalorder %s43, %s45
    %p52 = scmp.eq.s32.totalorder %s14, 1
    %p53 = por %p51, %p52
    %p54 = scmp.ne.s32.totalorder %s45, %s46
    %p55 = scmp.eq.s32.totalorder %s14, 0
    %p56 = por %p54, %p55
    %p57 = scmp.ne.s32.totalorder %s45, %s46
    %p58 = scmp.eq.s32.totalorder %s15, 1
    %p59 = por %p57, %p58
    %p61 = scmp.ne.s32.totalorder %s46, %s60
    %p62 = scmp.eq.s32.totalorder %s15, 0
    %p63 = por %p61, %p62
    %s65 = sadd.s32 %s64, 1
    %p68 = scmp.eq.s32.totalorder %s9, 1
    %p69 = scmp.ne.s32.totalorder %s64, %s66
    %p70 = scmp.eq.s32.totalorder %s9, 0
    %p71 = por %p69, %p70
    %p72 = scmp.ne.s32.totalorder %s64, %s66
    %p73 = scmp.eq.s32.totalorder %s14, 1
    %p74 = por %p72, %p73
    %p75 = scmp.ne.s32.totalorder %s66, %s67
    %p76 = scmp.eq.s32.totalorder %s14, 0
    %p77 = por %p75, %p76
    %p78 = scmp.ne.s32.totalorder %s66, %s67
    %p79 = scmp.eq.s32.totalorder %s15, 1
    %p80 = por %p78, %p79
    %p82 = scmp.ne.s32.totalorder %s67, %s81
    %p83 = scmp.eq.s32.totalorder %s15, 0
    %p84 = por %p82, %p83
    %s85 = ssub.s32 %s9, %s16
    %p86 = scmp.eq.s32.totalorder %s85, 0
    %s88 = sadd.s32 %s87, 1
    %s89 = scalar_select %p86, %s87, %s88
    %p92 = pneg %p86
    %p93 = scmp.eq.s32.totalorder %s9, 1
    %p94 = por %p92, %p93
    %p95 = scmp.ne.s32.totalorder %s87, %s90
    %p96 = scmp.eq.s32.totalorder %s9, 0
    %p97 = por %p95, %p96
    %p98 = scmp.ne.s32.totalorder %s87, %s90
    %p99 = scmp.eq.s32.totalorder %s14, 1
    %p100 = por %p98, %p99
    %p101 = scmp.ne.s32.totalorder %s90, %s91
    %p102 = scmp.eq.s32.totalorder %s14, 0
    %p103 = por %p101, %p102
    %p104 = scmp.ne.s32.totalorder %s90, %s91
    %p105 = scmp.eq.s32.totalorder %s15, 1
    %p106 = por %p104, %p105
    %p108 = scmp.ne.s32.totalorder %s91, %s107
    %p109 = scmp.eq.s32.totalorder %s15, 0
    %p110 = por %p108, %p109
    %p111 = scmp.le.s32.totalorder 1, %s9
    %p112 = scmp.lt.s32.totalorder %s9, 3
    %p113 = pnand %p111, %p112
    %p114 = pneg %p113
    // Predicated region
    $region9: #{basic_res_block_forward.5} parent=5 // pred_check
      _
    $region10: #{basic_res_block_forward.5} parent=5 // pred_check_branch
      %116 = sbr.rel (%p113) target = $region12
    $region11: #{basic_res_block_forward.5} parent=5 // pred_region
      %s117 = ssub.s32 %s9, 1
      // Predicated region
      $region13: #{basic_res_block_forward.5} parent=11 // pred_check
        %p118 = pneg %p56
      $region14: #{basic_res_block_forward.5} parent=11 // pred_check_branch
        %120 = sbr.rel (%p118) target = $region16
      $region15: #{basic_res_block_forward.5} parent=11 // pred_region
        _
      $region16: #{basic_res_block_forward.5} parent=11 // pred_fallthru
        _
      // Predicated region
      $region17: #{basic_res_block_forward.5} parent=11 // pred_check
        %p121 = pneg %p77
      $region18: #{basic_res_block_forward.5} parent=11 // pred_check_branch
        %123 = sbr.rel (%p121) target = $region20
      $region19: #{basic_res_block_forward.5} parent=11 // pred_region
        _
      $region20: #{basic_res_block_forward.5} parent=11 // pred_fallthru
        _
    $region12: #{basic_res_block_forward.5} parent=5 // pred_fallthru
      _
    %p124 = scmp.lt.s32.totalorder %s9, 2
    // Predicated region
    $region21: #{basic_res_block_forward.5} parent=5 // pred_check
      %p125 = pneg %p124
    $region22: #{basic_res_block_forward.5} parent=5 // pred_check_branch
      %127 = sbr.rel (%p125) target = $region24
    $region23: #{basic_res_block_forward.5} parent=5 // pred_region
      // Predicated region
      $region25: #{basic_res_block_forward.5} parent=23 // pred_check
        %p128 = pneg %p29
      $region26: #{basic_res_block_forward.5} parent=23 // pred_check_branch
        %130 = sbr.rel (%p128) target = $region28
      $region27: #{basic_res_block_forward.5} parent=23 // pred_region
        %s131 = smul.u32 8, %s9
        %p132 = scmp.lt.s32.totalorder %s131, 15
        %s133 = scalar_select %p132, %s131, 15
        %s134 = smul.addr %s133, 4
        %s135 = scalar_lea.vmem %s0, %s134
        %s136 = smul.u32 8, %s9
      $region28: #{basic_res_block_forward.5} parent=23 // pred_fallthru
        _
    $region24: #{basic_res_block_forward.5} parent=5 // pred_fallthru
      _
    %p137 = scmp.le.s32.totalorder 1, %s9
    %p138 = scmp.lt.s32.totalorder %s9, 3
    %p139 = pnand %p137, %p138
    %p140 = pneg %p139
    // Predicated region
    $region29: #{basic_res_block_forward.5} parent=5 // pred_check
      _
    $region30: #{basic_res_block_forward.5} parent=5 // pred_check_branch
      %142 = sbr.rel (%p139) target = $region32
    $region31: #{basic_res_block_forward.5} parent=5 // pred_region
      %s143 = ssub.s32 %s9, 1
      %s144 = smul.u32 8, %s14
      %p145 = scmp.lt.s32.totalorder %s144, 15
      %s146 = scalar_select %p145, %s144, 15
      %s147 = smul.addr %s146, 4
      %s148 = scalar_lea.vmem %s0, %s147
      %p149 = pneg %p35
      %p150 = pneg %p32
      %p151 = pneg %p56
      %p152 = pneg %p53
      %p153 = pneg %p77
      %p154 = pneg %p74
      %p155 = pneg %p103
      %p156 = pneg %p100
      %s157 = smul.u32 8, %s14
      %p158 = scmp.lt.s32.totalorder %s157, 15
      %s159 = scalar_select %p158, %s157, 15
      %s160 = smul.addr %s159, 4
      %s161 = scalar_lea.vmem %s3, %s160
      %s162 = smul.u32 8, %s14
      %p163 = scmp.lt.s32.totalorder %s162, 15
      %s164 = scalar_select %p163, %s162, 15
      %s165 = smul.addr %s164, 4
      %s166 = scalar_lea.vmem %s0, %s165
      %s167 = smul.u32 8, %s14
      %s168 = smul.u32 8, %s14
      %p169 = scmp.lt.s32.totalorder %s168, 15
      %s170 = scalar_select %p169, %s168, 15
      %s171 = smul.addr %s170, 4
      %s172 = scalar_lea.vmem %s3, %s171
      %s173 = smul.u32 8, %s14
      %v174 = vld [vmem:[%s166] sm:$0xf]
      %v175 = vld [vmem:[%s166 + $0x4] sm:$0xf]
      %v176 = vld [vmem:[%s166 + $0x8] sm:$0xf]
      %v177 = vld [vmem:[%s166 + $0xc] sm:$0xf]
      %v178 = vld [vmem:[%s166 + $0x10] sm:$0xf]
      %v179 = vld [vmem:[%s166 + $0x14] sm:$0xf]
      %v180 = vld [vmem:[%s166 + $0x18] sm:$0xf]
      %v181 = vld [vmem:[%s166 + $0x1c] sm:$0xf]
      %v182 = vunpack.c.l.bf16 %v174
      %v183 = vunpack.c.l.bf16 %v175
      %v184 = vunpack.c.l.bf16 %v176
      %v185 = vunpack.c.l.bf16 %v177
      %v186 = vunpack.c.l.bf16 %v178
      %v187 = vunpack.c.l.bf16 %v179
      %v188 = vunpack.c.l.bf16 %v180
      %v189 = vunpack.c.l.bf16 %v181
      %v190 = vld [vmem:[%s1] sm:$0x1]
      %v192 = vperm.slane %v190, 0
      %v194 = vmul.f32 %v182, %v192
      %v195 = vmul.f32 %v183, %v192
      %v196 = vmul.f32 %v184, %v192
      %v197 = vmul.f32 %v185, %v192
      %v198 = vmul.f32 %v186, %v192
      %v199 = vmul.f32 %v187, %v192
      %v200 = vmul.f32 %v188, %v192
      %v201 = vmul.f32 %v189, %v192
      %v202 = vld [vmem:[%s2] sm:$0x1]
      %v204 = vperm.slane %v202, 0
      %v206 = vadd.f32 %v194, %v204
      %v207 = vadd.f32 %v195, %v204
      %v208 = vadd.f32 %v196, %v204
      %v209 = vadd.f32 %v197, %v204
      %v210 = vadd.f32 %v198, %v204
      %v211 = vadd.f32 %v199, %v204
      %v212 = vadd.f32 %v200, %v204
      %v213 = vadd.f32 %v201, %v204
      %v214 = vmax.f32 %v206, 0.0
      %v215 = vmax.f32 %v207, 0.0
      %v216 = vmax.f32 %v208, 0.0
      %v217 = vmax.f32 %v209, 0.0
      %v218 = vmax.f32 %v210, 0.0
      %v219 = vmax.f32 %v211, 0.0
      %v220 = vmax.f32 %v212, 0.0
      %v221 = vmax.f32 %v213, 0.0
      %v222 = vpack.c.bf16 %v214, %v214
      %v223 = vpack.c.bf16 %v215, %v215
      %v224 = vpack.c.bf16 %v216, %v216
      %v225 = vpack.c.bf16 %v217, %v217
      %v226 = vpack.c.bf16 %v218, %v218
      %v227 = vpack.c.bf16 %v219, %v219
      %v228 = vpack.c.bf16 %v220, %v220
      %v229 = vpack.c.bf16 %v221, %v221
      %230 = vst [vmem:[%s172] sm:$0xf] %v222
      %231 = vst [vmem:[%s172 + $0x4] sm:$0xf] %v223
      %232 = vst [vmem:[%s172 + $0x8] sm:$0xf] %v224
      %233 = vst [vmem:[%s172 + $0xc] sm:$0xf] %v225
      %234 = vst [vmem:[%s172 + $0x10] sm:$0xf] %v226
      %235 = vst [vmem:[%s172 + $0x14] sm:$0xf] %v227
      %236 = vst [vmem:[%s172 + $0x18] sm:$0xf] %v228
      %237 = vst [vmem:[%s172 + $0x1c] sm:$0xf] %v229
      %s238 = smul.u32 8, %s14
      %p239 = scmp.lt.s32.totalorder %s238, 15
      %s240 = scalar_select %p239, %s238, 15
      %s241 = smul.addr %s240, 4
      %s242 = scalar_lea.vmem %s3, %s241
      // Predicated region
      $region33: #{basic_res_block_forward.5} parent=31 // pred_check
        %p243 = pneg %p100
      $region34: #{basic_res_block_forward.5} parent=31 // pred_check_branch
        %245 = sbr.rel (%p243) target = $region36
      $region35: #{basic_res_block_forward.5} parent=31 // pred_region
        %s246 = smul.u32 8, %s14
      $region36: #{basic_res_block_forward.5} parent=31 // pred_fallthru
        _
    $region32: #{basic_res_block_forward.5} parent=5 // pred_fallthru
      _
    %p247 = scmp.le.s32.totalorder 2, %s9
    // Predicated region
    $region37: #{basic_res_block_forward.5} parent=5 // pred_check
      %p248 = pneg %p247
    $region38: #{basic_res_block_forward.5} parent=5 // pred_check_branch
      %250 = sbr.rel (%p248) target = $region40
    $region39: #{basic_res_block_forward.5} parent=5 // pred_region
      %s251 = ssub.s32 %s9, 2
      // Predicated region
      $region41: #{basic_res_block_forward.5} parent=39 // pred_check
        %p252 = pneg %p106
      $region42: #{basic_res_block_forward.5} parent=39 // pred_check_branch
        %254 = sbr.rel (%p252) target = $region44
      $region43: #{basic_res_block_forward.5} parent=39 // pred_region
        %s255 = smul.u32 8, %s15
        %p256 = scmp.lt.s32.totalorder %s255, 15
        %s257 = scalar_select %p256, %s255, 15
        %s258 = smul.addr %s257, 4
        %s259 = scalar_lea.vmem %s3, %s258
      $region44: #{basic_res_block_forward.5} parent=39 // pred_fallthru
        _
    $region40: #{basic_res_block_forward.5} parent=5 // pred_fallthru
      _
  $region6: #{basic_res_block_forward.5} parent=0 // loop_footer
    %s13 = sadd.s32 1, %s9
  $region7: #{basic_res_block_forward.5} parent=0 // loop_footer_branch
    %8 = sbr.rel target = $region3
  $region8: #{basic_res_block_forward.5} parent=0 // loop_exit
    _

// kernel: basic_res_block_forward.4
$region0: #{basic_res_block_forward.4}
  #allocation0 [shape = 'u32[]', space=smem, size = 0x4, offset = 0x4, fixed_abs, tag = 'smem constant byte address 0x4 - core index']
  #allocation1 [shape = 'u32[72,128]{1,0:T(1,128)}', space=vmem, size = 0x9000, scoped, tag = 'internal scratch']
  %s0 = inlined_call_operand.vmem [shape: bf16[128,36], index: 0, kind: input, shape index: {}]
  %s1 = inlined_call_operand.vmem [shape: bf16[36,128], index: 1, kind: input, shape index: {}]
  %s2 = inlined_call_operand.vmem [shape: bf16[128,4], index: 2, kind: input, shape index: {}]
  %s3 = inlined_call_operand.vmem [shape: bf16[4,128], index: 3, kind: input, shape index: {}]
  %s4 = inlined_call_operand.vmem [shape: bf16[128,128], index: 4, kind: output, shape index: {0}]
  %s5 = inlined_call_operand.vmem [shape: f32[16,128], index: 5, kind: output, shape index: {1}]
  %s6 = inlined_call_operand.vmem [shape: bf16[128,128], index: 6, kind: output, shape index: {2}]
  %s7 = inlined_call_operand.vmem [shape: f32[16,128], index: 7, kind: output, shape index: {3}]
  %8 = xla_tuple %s4, %s5, %s6, %s7
  %s9 = sld [smem:[#allocation0]]
  $region73: #{basic_res_block_forward.4} parent=0
    _
  %s11 = ssub.s32 1, %s9
  %s12 = scalar_select 0, %s11, %s9
  loop: start=0, step=1, limit=4
  $region2: #{basic_res_block_forward.4} parent=0 // loop_pre_header
    _
  $region3: #{basic_res_block_forward.4} parent=0 // loop_header
    %s14 = sphi 0, %s18
    %p15 = scmp.ge.s32.totalorder %s14, 4
    %s24 = sphi 0, %s26
    %s27 = sphi 0, %s24
    %s28 = sphi 0, %s27
    %s44 = sphi 0, %s28
    %s48 = sphi 0, %s48
    %s50 = sphi 0, %s48
    %s51 = sphi 0, %s50
    %s65 = sphi 0, %s51
    %s71 = sphi 0, %s73
    %s74 = sphi 0, %s71
    %s75 = sphi 0, %s74
    %s91 = sphi 0, %s75
    %s95 = sphi 0, %s95
    %s97 = sphi 0, %s95
    %s98 = sphi 0, %s97
    %s112 = sphi 0, %s98
    %s118 = sphi 0, %s120
    %s121 = sphi 0, %s118
    %s122 = sphi 0, %s121
    %s138 = sphi 0, %s122
    %s144 = sphi 0, %s146
    %s147 = sphi 0, %s144
    %s148 = sphi 0, %s147
    %s164 = sphi 0, %s148
    %s170 = sphi 0, %s172
    %s173 = sphi 0, %s170
    %s174 = sphi 0, %s173
    %s190 = sphi 0, %s174
    %s196 = sphi 0, %s198
    %s199 = sphi 0, %s196
    %s200 = sphi 0, %s199
    %s216 = sphi 0, %s200
  $region4: #{basic_res_block_forward.4} parent=0 // loop_header_branch
    %17 = sbr.rel (%p15) target = $region8
  $region5: #{basic_res_block_forward.4} parent=0 // loop_body
    %s19 = ssub.s32 %s14, 1
    %s20 = ssub.s32 %s14, 2
    %s21 = sadd.s32 %s14, 1
    %s22 = ssub.s32 %s14, %s21
    %p23 = scmp.eq.s32.totalorder %s22, 0
    %s25 = sadd.s32 %s24, 1
    %s26 = scalar_select %p23, %s24, %s25
    %p29 = pneg %p23
    %p30 = scmp.eq.s32.totalorder %s14, 1
    %p31 = por %p29, %p30
    %p32 = scmp.ne.s32.totalorder %s24, %s27
    %p33 = scmp.eq.s32.totalorder %s14, 0
    %p34 = por %p32, %p33
    %p35 = scmp.ne.s32.totalorder %s24, %s27
    %p36 = scmp.eq.s32.totalorder %s19, 1
    %p37 = por %p35, %p36
    %p38 = scmp.ne.s32.totalorder %s27, %s28
    %p39 = scmp.eq.s32.totalorder %s19, 0
    %p40 = por %p38, %p39
    %p41 = scmp.ne.s32.totalorder %s27, %s28
    %p42 = scmp.eq.s32.totalorder %s20, 1
    %p43 = por %p41, %p42
    %p45 = scmp.ne.s32.totalorder %s28, %s44
    %p46 = scmp.eq.s32.totalorder %s20, 0
    %p47 = por %p45, %p46
    %s49 = sadd.s32 %s48, 1
    %p52 = scmp.eq.s32.totalorder %s14, 1
    %p53 = scmp.ne.s32.totalorder %s48, %s50
    %p54 = scmp.eq.s32.totalorder %s14, 0
    %p55 = por %p53, %p54
    %p56 = scmp.ne.s32.totalorder %s48, %s50
    %p57 = scmp.eq.s32.totalorder %s19, 1
    %p58 = por %p56, %p57
    %p59 = scmp.ne.s32.totalorder %s50, %s51
    %p60 = scmp.eq.s32.totalorder %s19, 0
    %p61 = por %p59, %p60
    %p62 = scmp.ne.s32.totalorder %s50, %s51
    %p63 = scmp.eq.s32.totalorder %s20, 1
    %p64 = por %p62, %p63
    %p66 = scmp.ne.s32.totalorder %s51, %s65
    %p67 = scmp.eq.s32.totalorder %s20, 0
    %p68 = por %p66, %p67
    %s69 = ssub.s32 %s14, %s21
    %p70 = scmp.eq.s32.totalorder %s69, 0
    %s72 = sadd.s32 %s71, 1
    %s73 = scalar_select %p70, %s71, %s72
    %p76 = pneg %p70
    %p77 = scmp.eq.s32.totalorder %s14, 1
    %p78 = por %p76, %p77
    %p79 = scmp.ne.s32.totalorder %s71, %s74
    %p80 = scmp.eq.s32.totalorder %s14, 0
    %p81 = por %p79, %p80
    %p82 = scmp.ne.s32.totalorder %s71, %s74
    %p83 = scmp.eq.s32.totalorder %s19, 1
    %p84 = por %p82, %p83
    %p85 = scmp.ne.s32.totalorder %s74, %s75
    %p86 = scmp.eq.s32.totalorder %s19, 0
    %p87 = por %p85, %p86
    %p88 = scmp.ne.s32.totalorder %s74, %s75
    %p89 = scmp.eq.s32.totalorder %s20, 1
    %p90 = por %p88, %p89
    %p92 = scmp.ne.s32.totalorder %s75, %s91
    %p93 = scmp.eq.s32.totalorder %s20, 0
    %p94 = por %p92, %p93
    %s96 = sadd.s32 %s95, 1
    %p99 = scmp.eq.s32.totalorder %s14, 1
    %p100 = scmp.ne.s32.totalorder %s95, %s97
    %p101 = scmp.eq.s32.totalorder %s14, 0
    %p102 = por %p100, %p101
    %p103 = scmp.ne.s32.totalorder %s95, %s97
    %p104 = scmp.eq.s32.totalorder %s19, 1
    %p105 = por %p103, %p104
    %p106 = scmp.ne.s32.totalorder %s97, %s98
    %p107 = scmp.eq.s32.totalorder %s19, 0
    %p108 = por %p106, %p107
    %p109 = scmp.ne.s32.totalorder %s97, %s98
    %p110 = scmp.eq.s32.totalorder %s20, 1
    %p111 = por %p109, %p110
    %p113 = scmp.ne.s32.totalorder %s98, %s112
    %p114 = scmp.eq.s32.totalorder %s20, 0
    %p115 = por %p113, %p114
    %s116 = ssub.s32 %s14, %s21
    %p117 = scmp.eq.s32.totalorder %s116, 0
    %s119 = sadd.s32 %s118, 1
    %s120 = scalar_select %p117, %s118, %s119
    %p123 = pneg %p117
    %p124 = scmp.eq.s32.totalorder %s14, 1
    %p125 = por %p123, %p124
    %p126 = scmp.ne.s32.totalorder %s118, %s121
    %p127 = scmp.eq.s32.totalorder %s14, 0
    %p128 = por %p126, %p127
    %p129 = scmp.ne.s32.totalorder %s118, %s121
    %p130 = scmp.eq.s32.totalorder %s19, 1
    %p131 = por %p129, %p130
    %p132 = scmp.ne.s32.totalorder %s121, %s122
    %p133 = scmp.eq.s32.totalorder %s19, 0
    %p134 = por %p132, %p133
    %p135 = scmp.ne.s32.totalorder %s121, %s122
    %p136 = scmp.eq.s32.totalorder %s20, 1
    %p137 = por %p135, %p136
    %p139 = scmp.ne.s32.totalorder %s122, %s138
    %p140 = scmp.eq.s32.totalorder %s20, 0
    %p141 = por %p139, %p140
    %s142 = ssub.s32 %s14, %s21
    %p143 = scmp.eq.s32.totalorder %s142, 0
    %s145 = sadd.s32 %s144, 1
    %s146 = scalar_select %p143, %s144, %s145
    %p149 = pneg %p143
    %p150 = scmp.eq.s32.totalorder %s14, 1
    %p151 = por %p149, %p150
    %p152 = scmp.ne.s32.totalorder %s144, %s147
    %p153 = scmp.eq.s32.totalorder %s14, 0
    %p154 = por %p152, %p153
    %p155 = scmp.ne.s32.totalorder %s144, %s147
    %p156 = scmp.eq.s32.totalorder %s19, 1
    %p157 = por %p155, %p156
    %p158 = scmp.ne.s32.totalorder %s147, %s148
    %p159 = scmp.eq.s32.totalorder %s19, 0
    %p160 = por %p158, %p159
    %p161 = scmp.ne.s32.totalorder %s147, %s148
    %p162 = scmp.eq.s32.totalorder %s20, 1
    %p163 = por %p161, %p162
    %p165 = scmp.ne.s32.totalorder %s148, %s164
    %p166 = scmp.eq.s32.totalorder %s20, 0
    %p167 = por %p165, %p166
    %s168 = ssub.s32 %s14, %s21
    %p169 = scmp.eq.s32.totalorder %s168, 0
    %s171 = sadd.s32 %s170, 1
    %s172 = scalar_select %p169, %s170, %s171
    %p175 = pneg %p169
    %p176 = scmp.eq.s32.totalorder %s14, 1
    %p177 = por %p175, %p176
    %p178 = scmp.ne.s32.totalorder %s170, %s173
    %p179 = scmp.eq.s32.totalorder %s14, 0
    %p180 = por %p178, %p179
    %p181 = scmp.ne.s32.totalorder %s170, %s173
    %p182 = scmp.eq.s32.totalorder %s19, 1
    %p183 = por %p181, %p182
    %p184 = scmp.ne.s32.totalorder %s173, %s174
    %p185 = scmp.eq.s32.totalorder %s19, 0
    %p186 = por %p184, %p185
    %p187 = scmp.ne.s32.totalorder %s173, %s174
    %p188 = scmp.eq.s32.totalorder %s20, 1
    %p189 = por %p187, %p188
    %p191 = scmp.ne.s32.totalorder %s174, %s190
    %p192 = scmp.eq.s32.totalorder %s20, 0
    %p193 = por %p191, %p192
    %s194 = ssub.s32 %s14, %s21
    %p195 = scmp.eq.s32.totalorder %s194, 0
    %s197 = sadd.s32 %s196, 1
    %s198 = scalar_select %p195, %s196, %s197
    %p201 = pneg %p195
    %p202 = scmp.eq.s32.totalorder %s14, 1
    %p203 = por %p201, %p202
    %p204 = scmp.ne.s32.totalorder %s196, %s199
    %p205 = scmp.eq.s32.totalorder %s14, 0
    %p206 = por %p204, %p205
    %p207 = scmp.ne.s32.totalorder %s196, %s199
    %p208 = scmp.eq.s32.totalorder %s19, 1
    %p209 = por %p207, %p208
    %p210 = scmp.ne.s32.totalorder %s199, %s200
    %p211 = scmp.eq.s32.totalorder %s19, 0
    %p212 = por %p210, %p211
    %p213 = scmp.ne.s32.totalorder %s199, %s200
    %p214 = scmp.eq.s32.totalorder %s20, 1
    %p215 = por %p213, %p214
    %p217 = scmp.ne.s32.totalorder %s200, %s216
    %p218 = scmp.eq.s32.totalorder %s20, 0
    %p219 = por %p217, %p218
    %p220 = scmp.le.s32.totalorder 1, %s14
    %p221 = scmp.lt.s32.totalorder %s14, 3
    %p222 = pnand %p220, %p221
    %p223 = pneg %p222
    // Predicated region
    $region9: #{basic_res_block_forward.4} parent=5 // pred_check
      _
    $region10: #{basic_res_block_forward.4} parent=5 // pred_check_branch
      %225 = sbr.rel (%p222) target = $region12
    $region11: #{basic_res_block_forward.4} parent=5 // pred_region
      %s226 = ssub.s32 %s14, 1
      // Predicated region
      $region13: #{basic_res_block_forward.4} parent=11 // pred_check
        %p227 = pneg %p61
      $region14: #{basic_res_block_forward.4} parent=11 // pred_check_branch
        %229 = sbr.rel (%p227) target = $region16
      $region15: #{basic_res_block_forward.4} parent=11 // pred_region
        _
      $region16: #{basic_res_block_forward.4} parent=11 // pred_fallthru
        _
      // Predicated region
      $region17: #{basic_res_block_forward.4} parent=11 // pred_check
        %p230 = pneg %p108
      $region18: #{basic_res_block_forward.4} parent=11 // pred_check_branch
        %232 = sbr.rel (%p230) target = $region20
      $region19: #{basic_res_block_forward.4} parent=11 // pred_region
        _
      $region20: #{basic_res_block_forward.4} parent=11 // pred_fallthru
        _
    $region12: #{basic_res_block_forward.4} parent=5 // pred_fallthru
      _
    %p233 = scmp.lt.s32.totalorder %s14, 2
    // Predicated region
    $region21: #{basic_res_block_forward.4} parent=5 // pred_check
      %p234 = pneg %p233
    $region22: #{basic_res_block_forward.4} parent=5 // pred_check_branch
      %236 = sbr.rel (%p234) target = $region24
    $region23: #{basic_res_block_forward.4} parent=5 // pred_region
      // Predicated region
      $region25: #{basic_res_block_forward.4} parent=23 // pred_check
        %p237 = pneg %p34
      $region26: #{basic_res_block_forward.4} parent=23 // pred_check_branch
        %239 = sbr.rel (%p237) target = $region28
      $region27: #{basic_res_block_forward.4} parent=23 // pred_region
        %s240 = smul.u32 8, %s14
        %p241 = scmp.lt.s32.totalorder %s240, 15
        %s242 = scalar_select %p241, %s240, 15
        %s243 = smul.addr %s242, 4
        %s244 = scalar_lea.vmem %s0, %s243
        %s245 = smul.u32 8, %s14
      $region28: #{basic_res_block_forward.4} parent=23 // pred_fallthru
        _
      // Predicated region
      $region29: #{basic_res_block_forward.4} parent=23 // pred_check
        %p246 = pneg %p81
      $region30: #{basic_res_block_forward.4} parent=23 // pred_check_branch
        %248 = sbr.rel (%p246) target = $region32
      $region31: #{basic_res_block_forward.4} parent=23 // pred_region
        %s249 = smul.u32 8, %s14
        %p250 = scmp.lt.s32.totalorder %s249, 15
        %s251 = scalar_select %p250, %s249, 15
        %s252 = smul.addr %s251, 4
        %s253 = scalar_lea.vmem %s2, %s252
        %s254 = smul.u32 8, %s14
      $region32: #{basic_res_block_forward.4} parent=23 // pred_fallthru
        _
    $region24: #{basic_res_block_forward.4} parent=5 // pred_fallthru
      _
    %p255 = scmp.le.s32.totalorder 1, %s14
    %p256 = scmp.lt.s32.totalorder %s14, 3
    %p257 = pnand %p255, %p256
    %p258 = pneg %p257
    // Predicated region
    $region33: #{basic_res_block_forward.4} parent=5 // pred_check
      _
    $region34: #{basic_res_block_forward.4} parent=5 // pred_check_branch
      %260 = sbr.rel (%p257) target = $region36
    $region35: #{basic_res_block_forward.4} parent=5 // pred_region
      %s261 = ssub.s32 %s14, 1
      %s262 = smul.u32 8, %s19
      %p263 = scmp.lt.s32.totalorder %s262, 15
      %s264 = scalar_select %p263, %s262, 15
      %s265 = smul.addr %s264, 4
      %s266 = scalar_lea.vmem %s0, %s265
      %p267 = pneg %p40
      %p268 = pneg %p37
      %p269 = pneg %p61
      %p270 = pneg %p58
      %s271 = smul.u32 8, %s19
      %p272 = scmp.lt.s32.totalorder %s271, 15
      %s273 = scalar_select %p272, %s271, 15
      %s274 = smul.addr %s273, 4
      %s275 = scalar_lea.vmem %s2, %s274
      %p276 = pneg %p87
      %p277 = pneg %p84
      %p278 = pneg %p108
      %p279 = pneg %p105
      %p280 = pneg %p134
      %p281 = pneg %p131
      %s282 = smul.u32 8, %s19
      %p283 = scmp.lt.s32.totalorder %s282, 15
      %s284 = scalar_select %p283, %s282, 15
      %s285 = smul.addr %s284, 4
      %s286 = scalar_lea.vmem %s4, %s285
      %p287 = pneg %p160
      %p288 = pneg %p157
      %p289 = scmp.lt.s32.totalorder %s19, 1
      %s290 = scalar_select %p289, %s19, 1
      %s291 = smul.addr %s290, 8
      %s292 = scalar_lea.vmem %s5, %s291
      %p293 = pneg %p186
      %p294 = pneg %p183
      %s295 = smul.u32 8, %s19
      %p296 = scmp.lt.s32.totalorder %s295, 15
      %s297 = scalar_select %p296, %s295, 15
      %s298 = smul.addr %s297, 4
      %s299 = scalar_lea.vmem %s6, %s298
      %p300 = pneg %p212
      %p301 = pneg %p209
      %p302 = scmp.lt.s32.totalorder %s19, 1
      %s303 = scalar_select %p302, %s19, 1
      %s304 = smul.addr %s303, 8
      %s305 = scalar_lea.vmem %s7, %s304
      %s306 = smul.u32 8, %s19
      %p307 = scmp.lt.s32.totalorder %s306, 15
      %s308 = scalar_select %p307, %s306, 15
      %s309 = smul.addr %s308, 4
      %s310 = scalar_lea.vmem %s0, %s309
      %s311 = smul.u32 8, %s19
      %s312 = smul.u32 8, %s19
      %p313 = scmp.lt.s32.totalorder %s312, 15
      %s314 = scalar_select %p313, %s312, 15
      %s315 = smul.addr %s314, 4
      %s316 = scalar_lea.vmem %s2, %s315
      %s317 = smul.u32 8, %s19
      %s318 = smul.u32 8, %s19
      %p319 = scmp.lt.s32.totalorder %s318, 15
      %s320 = scalar_select %p319, %s318, 15
      %s321 = smul.addr %s320, 4
      %s322 = scalar_lea.vmem %s4, %s321
      %s323 = smul.u32 8, %s19
      %p324 = scmp.lt.s32.totalorder %s19, 1
      %s325 = scalar_select %p324, %s19, 1
      %s326 = smul.addr %s325, 8
      %s327 = scalar_lea.vmem %s5, %s326
      %s328 = smul.u32 8, %s19
      %p329 = scmp.lt.s32.totalorder %s328, 15
      %s330 = scalar_select %p329, %s328, 15
      %s331 = smul.addr %s330, 4
      %s332 = scalar_lea.vmem %s6, %s331
      %s333 = smul.u32 8, %s19
      %p334 = scmp.lt.s32.totalorder %s19, 1
      %s335 = scalar_select %p334, %s19, 1
      %s336 = smul.addr %s335, 8
      %s337 = scalar_lea.vmem %s7, %s336
      %v339 = vld [vmem:[%s310] sm:$0xf]
      %v340 = vld [vmem:[%s310 + $0x4] sm:$0xf]
      %v341 = vld [vmem:[%s310 + $0x8] sm:$0xf]
      %v342 = vld [vmem:[%s310 + $0xc] sm:$0xf]
      %v343 = vld [vmem:[%s310 + $0x10] sm:$0xf]
      %v344 = vld [vmem:[%s310 + $0x14] sm:$0xf]
      %v345 = vld [vmem:[%s310 + $0x18] sm:$0xf]
      %v346 = vld [vmem:[%s310 + $0x1c] sm:$0xf]
      %v347 = vld [vmem:[%s1] sm:$0xf]
      %v348 = vld [vmem:[%s1 + $0x4] sm:$0xf]
      %v349 = vld [vmem:[%s1 + $0x8] sm:$0xf]
      %v350 = vld [vmem:[%s1 + $0xc] sm:$0xf]
      %v351 = vld [vmem:[%s1 + $0x10] sm:$0x3]
      %v360 = vunpack.c.l.b16 %v339
      %v361 = vunpack.c.l.b16 %v340
      %v362 = vunpack.c.l.b16 %v341
      %v363 = vunpack.c.l.b16 %v342
      %v364 = vunpack.c.l.b16 %v343
      %v365 = vunpack.c.l.b16 %v344
      %v366 = vunpack.c.l.b16 %v345
      %v367 = vunpack.c.l.b16 %v346
      %v368 = vpack.c.b16 %v361, %v360
      %v369 = vpack.c.b16 %v363, %v362
      %v370 = vpack.c.b16 %v365, %v364
      %v371 = vpack.c.b16 %v367, %v366
      %v377 = vunpack.c.l.b16 %v347
      %v378 = vunpack.c.l.b16 %v348
      %v379 = vunpack.c.l.b16 %v349
      %v380 = vunpack.c.l.b16 %v350
      %v381 = vunpack.c.l.b16 %v351
      %v382 = vpack.c.b16 %v378, %v377
      %v383 = vpack.c.b16 %v380, %v379
      %v384 = vpack.c.b16 %v381, %v381
      %vm387 = vcmask 293888
      %v389 = vsel %vm387, %v368, 0
      %v392 = vsel %vm387, %v369, 0
      %v395 = vsel %vm387, %v370, 0
      %v398 = vsel %vm387, %v371, 0
      %vm400 = vcmask 1041408
      %v402 = vsel %vm400, %v384, 0
      %404 = vmatpush.bf16.msra.mxu0 0
      %405 = vmatpush.bf16.msra.mxu0 0
      %406 = vmatpush.bf16.msra.mxu0 0
      %407 = vmatpush.bf16.msra.mxu0 0
      %408 = vmatpush.bf16.msra.mxu0 0
      %409 = vmatpush.bf16.msra.mxu0 %v402
      %410 = vmatpush.bf16.msra.mxu0 %v383
      %411 = vmatpush.bf16.msra.mxu0 %v382
      %412 = vmatmul.bf16.gmra.mxu0 %v389
      %v413 = vpop.f32.mrf.mxu0
      %v414 = vadd.f32 0.0, %v413
      %v415 = vpop.f32.mrf.mxu0
      %v416 = vadd.f32 0.0, %v415
      %417 = vmatmul.bf16.gmra.mxu0 %v392
      %v418 = vpop.f32.mrf.mxu0
      %v419 = vadd.f32 0.0, %v418
      %v420 = vpop.f32.mrf.mxu0
      %v421 = vadd.f32 0.0, %v420
      %422 = vmatmul.bf16.gmra.mxu0 %v395
      %v423 = vpop.f32.mrf.mxu0
      %v424 = vadd.f32 0.0, %v423
      %v425 = vpop.f32.mrf.mxu0
      %v426 = vadd.f32 0.0, %v425
      %427 = vmatmul.bf16.gmra.mxu0 %v398
      %v428 = vpop.f32.mrf.mxu0
      %v429 = vadd.f32 0.0, %v428
      %v430 = vpop.f32.mrf.mxu0
      %v431 = vadd.f32 0.0, %v430
      %432 = vdwg.mxu0
      %v433 = vadd.f32 %v414, %v416
      %v434 = vadd.f32 %v433, %v419
      %v435 = vadd.f32 %v434, %v421
      %v436 = vadd.f32 %v435, %v424
      %v437 = vadd.f32 %v436, %v426
      %v438 = vadd.f32 %v437, %v429
      %v439 = vadd.f32 %v438, %v431
      %v440 = vrot.slane %v439, 4
      %v441 = vadd.f32 %v439, %v440
      %v442 = vrot.slane %v441, 2
      %v443 = vadd.f32 %v441, %v442
      %v444 = vrot.slane %v443, 1
      %v445 = vadd.f32 %v443, %v444
      %v446 = vrcp.pop 64.0
      %v447 = vmul.f32 64.0, %v446
      %v448 = vsub.f32 1.0, %v447
      %v449 = vmul.f32 %v446, %v448
      %v450 = vadd.f32 %v446, %v449
      %vm451 = vweird.f32 %v446
      %v452 = vsel %vm451, %v446, %v450
      %v453 = vmul.f32 %v445, %v452
      %v454 = vsub.f32 %v414, %v453
      %v455 = vsub.f32 %v416, %v453
      %v456 = vsub.f32 %v419, %v453
      %v457 = vsub.f32 %v421, %v453
      %v458 = vsub.f32 %v424, %v453
      %v459 = vsub.f32 %v426, %v453
      %v460 = vsub.f32 %v429, %v453
      %v461 = vsub.f32 %v431, %v453
      %v462 = vmul.f32 %v454, %v454
      %v463 = vmul.f32 %v455, %v455
      %v464 = vmul.f32 %v456, %v456
      %v465 = vmul.f32 %v457, %v457
      %v466 = vmul.f32 %v458, %v458
      %v467 = vmul.f32 %v459, %v459
      %v468 = vmul.f32 %v460, %v460
      %v469 = vmul.f32 %v461, %v461
      %v470 = vadd.f32 %v462, %v463
      %v471 = vadd.f32 %v470, %v464
      %v472 = vadd.f32 %v471, %v465
      %v473 = vadd.f32 %v472, %v466
      %v474 = vadd.f32 %v473, %v467
      %v475 = vadd.f32 %v474, %v468
      %v476 = vadd.f32 %v475, %v469
      %v477 = vrot.slane %v476, 4
      %v478 = vadd.f32 %v476, %v477
      %v479 = vrot.slane %v478, 2
      %v480 = vadd.f32 %v478, %v479
      %v481 = vrot.slane %v480, 1
      %v482 = vadd.f32 %v480, %v481
      %vm483 = vcmask 1040384
      %v484 = vsel %vm483, %v445, %v482
      %v485 = vsel %vm400, %v484, 0.0
      %486 = vst [vmem:[%s327] sm:$0xff] %v485
      %v487 = vpack.c.bf16 %v414, %v414
      %v488 = vpack.c.bf16 %v416, %v416
      %v489 = vpack.c.bf16 %v419, %v419
      %v490 = vpack.c.bf16 %v421, %v421
      %v491 = vpack.c.bf16 %v424, %v424
      %v492 = vpack.c.bf16 %v426, %v426
      %v493 = vpack.c.bf16 %v429, %v429
      %v494 = vpack.c.bf16 %v431, %v431
      %495 = vst [vmem:[%s322] sm:$0xf] %v487
      %496 = vst [vmem:[%s322 + $0x4] sm:$0xf] %v488
      %497 = vst [vmem:[%s322 + $0x8] sm:$0xf] %v489
      %498 = vst [vmem:[%s322 + $0xc] sm:$0xf] %v490
      %499 = vst [vmem:[%s322 + $0x10] sm:$0xf] %v491
      %500 = vst [vmem:[%s322 + $0x14] sm:$0xf] %v492
      %501 = vst [vmem:[%s322 + $0x18] sm:$0xf] %v493
      %502 = vst [vmem:[%s322 + $0x1c] sm:$0xf] %v494
      %v503 = vld [vmem:[%s316] sm:$0xf]
      %v504 = vld [vmem:[%s316 + $0x4] sm:$0xf]
      %v505 = vld [vmem:[%s316 + $0x8] sm:$0xf]
      %v506 = vld [vmem:[%s316 + $0xc] sm:$0xf]
      %v507 = vld [vmem:[%s316 + $0x10] sm:$0xf]
      %v508 = vld [vmem:[%s316 + $0x14] sm:$0xf]
      %v509 = vld [vmem:[%s316 + $0x18] sm:$0xf]
      %v510 = vld [vmem:[%s316 + $0x1c] sm:$0xf]
      %v511 = vld [vmem:[%s3] sm:$0x3]
      %v520 = vunpack.c.l.b16 %v503
      %v521 = vunpack.c.l.b16 %v504
      %v522 = vunpack.c.l.b16 %v505
      %v523 = vunpack.c.l.b16 %v506
      %v524 = vunpack.c.l.b16 %v507
      %v525 = vunpack.c.l.b16 %v508
      %v526 = vunpack.c.l.b16 %v509
      %v527 = vunpack.c.l.b16 %v510
      %v528 = vpack.c.b16 %v521, %v520
      %v529 = vpack.c.b16 %v523, %v522
      %v530 = vpack.c.b16 %v525, %v524
      %v531 = vpack.c.b16 %v527, %v526
      %vm532 = vcmask 31744
      %v534 = vsel %vm532, %v528, 0
      %v537 = vsel %vm532, %v529, 0
      %v540 = vsel %vm532, %v530, 0
      %v543 = vsel %vm532, %v531, 0
      %v546 = vsel %vm400, %v511, 0
      %548 = vmatpush.bf16.msra.mxu0 0
      %549 = vmatpush.bf16.msra.mxu0 0
      %550 = vmatpush.bf16.msra.mxu0 0
      %551 = vmatpush.bf16.msra.mxu0 0
      %552 = vmatpush.bf16.msra.mxu0 0
      %553 = vmatpush.bf16.msra.mxu0 0
      %554 = vmatpush.bf16.msra.mxu0 0
      %555 = vmatpush.bf16.msra.mxu0 %v546
      %556 = vmatmul.bf16.gmra.mxu0 %v534
      %v557 = vpop.f32.mrf.mxu0
      %v558 = vadd.f32 0.0, %v557
      %v559 = vpop.f32.mrf.mxu0
      %v560 = vadd.f32 0.0, %v559
      %561 = vmatmul.bf16.gmra.mxu0 %v537
      %v562 = vpop.f32.mrf.mxu0
      %v563 = vadd.f32 0.0, %v562
      %v564 = vpop.f32.mrf.mxu0
      %v565 = vadd.f32 0.0, %v564
      %566 = vmatmul.bf16.gmra.mxu0 %v540
      %v567 = vpop.f32.mrf.mxu0
      %v568 = vadd.f32 0.0, %v567
      %v569 = vpop.f32.mrf.mxu0
      %v570 = vadd.f32 0.0, %v569
      %571 = vmatmul.bf16.gmra.mxu0 %v543
      %v572 = vpop.f32.mrf.mxu0
      %v573 = vadd.f32 0.0, %v572
      %v574 = vpop.f32.mrf.mxu0
      %v575 = vadd.f32 0.0, %v574
      %576 = vdwg.mxu0
      %v577 = vadd.f32 %v558, %v560
      %v578 = vadd.f32 %v577, %v563
      %v579 = vadd.f32 %v578, %v565
      %v580 = vadd.f32 %v579, %v568
      %v581 = vadd.f32 %v580, %v570
      %v582 = vadd.f32 %v581, %v573
      %v583 = vadd.f32 %v582, %v575
      %v584 = vrot.slane %v583, 4
      %v585 = vadd.f32 %v583, %v584
      %v586 = vrot.slane %v585, 2
      %v587 = vadd.f32 %v585, %v586
      %v588 = vrot.slane %v587, 1
      %v589 = vadd.f32 %v587, %v588
      %v590 = vmul.f32 %v589, %v452
      %v591 = vsub.f32 %v558, %v590
      %v592 = vsub.f32 %v560, %v590
      %v593 = vsub.f32 %v563, %v590
      %v594 = vsub.f32 %v565, %v590
      %v595 = vsub.f32 %v568, %v590
      %v596 = vsub.f32 %v570, %v590
      %v597 = vsub.f32 %v573, %v590
      %v598 = vsub.f32 %v575, %v590
      %v599 = vmul.f32 %v591, %v591
      %v600 = vmul.f32 %v592, %v592
      %v601 = vmul.f32 %v593, %v593
      %v602 = vmul.f32 %v594, %v594
      %v603 = vmul.f32 %v595, %v595
      %v604 = vmul.f32 %v596, %v596
      %v605 = vmul.f32 %v597, %v597
      %v606 = vmul.f32 %v598, %v598
      %v607 = vadd.f32 %v599, %v600
      %v608 = vadd.f32 %v607, %v601
      %v609 = vadd.f32 %v608, %v602
      %v610 = vadd.f32 %v609, %v603
      %v611 = vadd.f32 %v610, %v604
      %v612 = vadd.f32 %v611, %v605
      %v613 = vadd.f32 %v612, %v606
      %v614 = vrot.slane %v613, 4
      %v615 = vadd.f32 %v613, %v614
      %v616 = vrot.slane %v615, 2
      %v617 = vadd.f32 %v615, %v616
      %v618 = vrot.slane %v617, 1
      %v619 = vadd.f32 %v617, %v618
      %v620 = vsel %vm483, %v589, %v619
      %v621 = vsel %vm400, %v620, 0.0
      %622 = vst [vmem:[%s337] sm:$0xff] %v621
      %v623 = vpack.c.bf16 %v558, %v558
      %v624 = vpack.c.bf16 %v560, %v560
      %v625 = vpack.c.bf16 %v563, %v563
      %v626 = vpack.c.bf16 %v565, %v565
      %v627 = vpack.c.bf16 %v568, %v568
      %v628 = vpack.c.bf16 %v570, %v570
      %v629 = vpack.c.bf16 %v573, %v573
      %v630 = vpack.c.bf16 %v575, %v575
      %631 = vst [vmem:[%s332] sm:$0xf] %v623
      %632 = vst [vmem:[%s332 + $0x4] sm:$0xf] %v624
      %633 = vst [vmem:[%s332 + $0x8] sm:$0xf] %v625
      %634 = vst [vmem:[%s332 + $0xc] sm:$0xf] %v626
      %635 = vst [vmem:[%s332 + $0x10] sm:$0xf] %v627
      %636 = vst [vmem:[%s332 + $0x14] sm:$0xf] %v628
      %637 = vst [vmem:[%s332 + $0x18] sm:$0xf] %v629
      %638 = vst [vmem:[%s332 + $0x1c] sm:$0xf] %v630
      %s639 = smul.u32 8, %s19
      %p640 = scmp.lt.s32.totalorder %s639, 15
      %s641 = scalar_select %p640, %s639, 15
      %s642 = smul.addr %s641, 4
      %s643 = scalar_lea.vmem %s4, %s642
      %p644 = scmp.lt.s32.totalorder %s19, 1
      %s645 = scalar_select %p644, %s19, 1
      %s646 = smul.addr %s645, 8
      %s647 = scalar_lea.vmem %s5, %s646
      %s648 = smul.u32 8, %s19
      %p649 = scmp.lt.s32.totalorder %s648, 15
      %s650 = scalar_select %p649, %s648, 15
      %s651 = smul.addr %s650, 4
      %s652 = scalar_lea.vmem %s6, %s651
      %p653 = scmp.lt.s32.totalorder %s19, 1
      %s654 = scalar_select %p653, %s19, 1
      %s655 = smul.addr %s654, 8
      %s656 = scalar_lea.vmem %s7, %s655
      // Predicated region
      $region37: #{basic_res_block_forward.4} parent=35 // pred_check
        %p657 = pneg %p131
      $region38: #{basic_res_block_forward.4} parent=35 // pred_check_branch
        %659 = sbr.rel (%p657) target = $region40
      $region39: #{basic_res_block_forward.4} parent=35 // pred_region
        %s660 = smul.u32 8, %s19
      $region40: #{basic_res_block_forward.4} parent=35 // pred_fallthru
        _
      // Predicated region
      $region41: #{basic_res_block_forward.4} parent=35 // pred_check
        %p661 = pneg %p157
      $region42: #{basic_res_block_forward.4} parent=35 // pred_check_branch
        %663 = sbr.rel (%p661) target = $region44
      $region43: #{basic_res_block_forward.4} parent=35 // pred_region
        _
      $region44: #{basic_res_block_forward.4} parent=35 // pred_fallthru
        _
      // Predicated region
      $region45: #{basic_res_block_forward.4} parent=35 // pred_check
        %p664 = pneg %p183
      $region46: #{basic_res_block_forward.4} parent=35 // pred_check_branch
        %666 = sbr.rel (%p664) target = $region48
      $region47: #{basic_res_block_forward.4} parent=35 // pred_region
        %s667 = smul.u32 8, %s19
      $region48: #{basic_res_block_forward.4} parent=35 // pred_fallthru
        _
      // Predicated region
      $region49: #{basic_res_block_forward.4} parent=35 // pred_check
        %p668 = pneg %p209
      $region50: #{basic_res_block_forward.4} parent=35 // pred_check_branch
        %670 = sbr.rel (%p668) target = $region52
      $region51: #{basic_res_block_forward.4} parent=35 // pred_region
        _
      $region52: #{basic_res_block_forward.4} parent=35 // pred_fallthru
        _
    $region36: #{basic_res_block_forward.4} parent=5 // pred_fallthru
      _
    %p671 = scmp.le.s32.totalorder 2, %s14
    // Predicated region
    $region53: #{basic_res_block_forward.4} parent=5 // pred_check
      %p672 = pneg %p671
    $region54: #{basic_res_block_forward.4} parent=5 // pred_check_branch
      %674 = sbr.rel (%p672) target = $region56
    $region55: #{basic_res_block_forward.4} parent=5 // pred_region
      %s675 = ssub.s32 %s14, 2
      // Predicated region
      $region57: #{basic_res_block_forward.4} parent=55 // pred_check
        %p676 = pneg %p137
      $region58: #{basic_res_block_forward.4} parent=55 // pred_check_branch
        %678 = sbr.rel (%p676) target = $region60
      $region59: #{basic_res_block_forward.4} parent=55 // pred_region
        %s679 = smul.u32 8, %s20
        %p680 = scmp.lt.s32.totalorder %s679, 15
        %s681 = scalar_select %p680, %s679, 15
        %s682 = smul.addr %s681, 4
        %s683 = scalar_lea.vmem %s4, %s682
      $region60: #{basic_res_block_forward.4} parent=55 // pred_fallthru
        _
      // Predicated region
      $region61: #{basic_res_block_forward.4} parent=55 // pred_check
        %p684 = pneg %p163
      $region62: #{basic_res_block_forward.4} parent=55 // pred_check_branch
        %686 = sbr.rel (%p684) target = $region64
      $region63: #{basic_res_block_forward.4} parent=55 // pred_region
        %p687 = scmp.lt.s32.totalorder %s20, 1
        %s688 = scalar_select %p687, %s20, 1
        %s689 = smul.addr %s688, 8
        %s690 = scalar_lea.vmem %s5, %s689
      $region64: #{basic_res_block_forward.4} parent=55 // pred_fallthru
        _
      // Predicated region
      $region65: #{basic_res_block_forward.4} parent=55 // pred_check
        %p691 = pneg %p189
      $region66: #{basic_res_block_forward.4} parent=55 // pred_check_branch
        %693 = sbr.rel (%p691) target = $region68
      $region67: #{basic_res_block_forward.4} parent=55 // pred_region
        %s694 = smul.u32 8, %s20
        %p695 = scmp.lt.s32.totalorder %s694, 15
        %s696 = scalar_select %p695, %s694, 15
        %s697 = smul.addr %s696, 4
        %s698 = scalar_lea.vmem %s6, %s697
      $region68: #{basic_res_block_forward.4} parent=55 // pred_fallthru
        _
      // Predicated region
      $region69: #{basic_res_block_forward.4} parent=55 // pred_check
        %p699 = pneg %p215
      $region70: #{basic_res_block_forward.4} parent=55 // pred_check_branch
        %701 = sbr.rel (%p699) target = $region72
      $region71: #{basic_res_block_forward.4} parent=55 // pred_region
        %p702 = scmp.lt.s32.totalorder %s20, 1
        %s703 = scalar_select %p702, %s20, 1
        %s704 = smul.addr %s703, 8
        %s705 = scalar_lea.vmem %s7, %s704
      $region72: #{basic_res_block_forward.4} parent=55 // pred_fallthru
        _
    $region56: #{basic_res_block_forward.4} parent=5 // pred_fallthru
      _
  $region6: #{basic_res_block_forward.4} parent=0 // loop_footer
    %s18 = sadd.s32 1, %s14
  $region7: #{basic_res_block_forward.4} parent=0 // loop_footer_branch
    %13 = sbr.rel target = $region3
  $region8: #{basic_res_block_forward.4} parent=0 // loop_exit
    _

// kernel: basic_res_block_forward.6
$region0: #{basic_res_block_forward.6}
  #allocation0 [shape = 'u32[]', space=smem, size = 0x4, offset = 0x4, fixed_abs, tag = 'smem constant byte address 0x4 - core index']
  #allocation1 [shape = 'u32[72,128]{1,0:T(1,128)}', space=vmem, size = 0x9000, scoped, tag = 'internal scratch']
  %s0 = inlined_call_operand.vmem [shape: bf16[128,72], index: 0, kind: input, shape index: {}]
  %s1 = inlined_call_operand.vmem [shape: bf16[72,128], index: 1, kind: input, shape index: {}]
  %s2 = inlined_call_operand.vmem [shape: bf16[128,128], index: 2, kind: output, shape index: {0}]
  %s3 = inlined_call_operand.vmem [shape: f32[16,128], index: 3, kind: output, shape index: {1}]
  %4 = xla_tuple %s2, %s3
  %s5 = sld [smem:[#allocation0]]
  $region49: #{basic_res_block_forward.6} parent=0
    _
  %s7 = ssub.s32 1, %s5
  %s8 = scalar_select 0, %s7, %s5
  loop: start=0, step=1, limit=4
  $region2: #{basic_res_block_forward.6} parent=0 // loop_pre_header
    _
  $region3: #{basic_res_block_forward.6} parent=0 // loop_header
    %s10 = sphi 0, %s14
    %p11 = scmp.ge.s32.totalorder %s10, 4
    %s20 = sphi 0, %s22
    %s23 = sphi 0, %s20
    %s24 = sphi 0, %s23
    %s40 = sphi 0, %s24
    %s44 = sphi 0, %s44
    %s46 = sphi 0, %s44
    %s47 = sphi 0, %s46
    %s61 = sphi 0, %s47
    %s67 = sphi 0, %s69
    %s70 = sphi 0, %s67
    %s71 = sphi 0, %s70
    %s87 = sphi 0, %s71
    %s93 = sphi 0, %s95
    %s96 = sphi 0, %s93
    %s97 = sphi 0, %s96
    %s113 = sphi 0, %s97
  $region4: #{basic_res_block_forward.6} parent=0 // loop_header_branch
    %13 = sbr.rel (%p11) target = $region8
  $region5: #{basic_res_block_forward.6} parent=0 // loop_body
    %s15 = ssub.s32 %s10, 1
    %s16 = ssub.s32 %s10, 2
    %s17 = sadd.s32 %s10, 1
    %s18 = ssub.s32 %s10, %s17
    %p19 = scmp.eq.s32.totalorder %s18, 0
    %s21 = sadd.s32 %s20, 1
    %s22 = scalar_select %p19, %s20, %s21
    %p25 = pneg %p19
    %p26 = scmp.eq.s32.totalorder %s10, 1
    %p27 = por %p25, %p26
    %p28 = scmp.ne.s32.totalorder %s20, %s23
    %p29 = scmp.eq.s32.totalorder %s10, 0
    %p30 = por %p28, %p29
    %p31 = scmp.ne.s32.totalorder %s20, %s23
    %p32 = scmp.eq.s32.totalorder %s15, 1
    %p33 = por %p31, %p32
    %p34 = scmp.ne.s32.totalorder %s23, %s24
    %p35 = scmp.eq.s32.totalorder %s15, 0
    %p36 = por %p34, %p35
    %p37 = scmp.ne.s32.totalorder %s23, %s24
    %p38 = scmp.eq.s32.totalorder %s16, 1
    %p39 = por %p37, %p38
    %p41 = scmp.ne.s32.totalorder %s24, %s40
    %p42 = scmp.eq.s32.totalorder %s16, 0
    %p43 = por %p41, %p42
    %s45 = sadd.s32 %s44, 1
    %p48 = scmp.eq.s32.totalorder %s10, 1
    %p49 = scmp.ne.s32.totalorder %s44, %s46
    %p50 = scmp.eq.s32.totalorder %s10, 0
    %p51 = por %p49, %p50
    %p52 = scmp.ne.s32.totalorder %s44, %s46
    %p53 = scmp.eq.s32.totalorder %s15, 1
    %p54 = por %p52, %p53
    %p55 = scmp.ne.s32.totalorder %s46, %s47
    %p56 = scmp.eq.s32.totalorder %s15, 0
    %p57 = por %p55, %p56
    %p58 = scmp.ne.s32.totalorder %s46, %s47
    %p59 = scmp.eq.s32.totalorder %s16, 1
    %p60 = por %p58, %p59
    %p62 = scmp.ne.s32.totalorder %s47, %s61
    %p63 = scmp.eq.s32.totalorder %s16, 0
    %p64 = por %p62, %p63
    %s65 = ssub.s32 %s10, %s17
    %p66 = scmp.eq.s32.totalorder %s65, 0
    %s68 = sadd.s32 %s67, 1
    %s69 = scalar_select %p66, %s67, %s68
    %p72 = pneg %p66
    %p73 = scmp.eq.s32.totalorder %s10, 1
    %p74 = por %p72, %p73
    %p75 = scmp.ne.s32.totalorder %s67, %s70
    %p76 = scmp.eq.s32.totalorder %s10, 0
    %p77 = por %p75, %p76
    %p78 = scmp.ne.s32.totalorder %s67, %s70
    %p79 = scmp.eq.s32.totalorder %s15, 1
    %p80 = por %p78, %p79
    %p81 = scmp.ne.s32.totalorder %s70, %s71
    %p82 = scmp.eq.s32.totalorder %s15, 0
    %p83 = por %p81, %p82
    %p84 = scmp.ne.s32.totalorder %s70, %s71
    %p85 = scmp.eq.s32.totalorder %s16, 1
    %p86 = por %p84, %p85
    %p88 = scmp.ne.s32.totalorder %s71, %s87
    %p89 = scmp.eq.s32.totalorder %s16, 0
    %p90 = por %p88, %p89
    %s91 = ssub.s32 %s10, %s17
    %p92 = scmp.eq.s32.totalorder %s91, 0
    %s94 = sadd.s32 %s93, 1
    %s95 = scalar_select %p92, %s93, %s94
    %p98 = pneg %p92
    %p99 = scmp.eq.s32.totalorder %s10, 1
    %p100 = por %p98, %p99
    %p101 = scmp.ne.s32.totalorder %s93, %s96
    %p102 = scmp.eq.s32.totalorder %s10, 0
    %p103 = por %p101, %p102
    %p104 = scmp.ne.s32.totalorder %s93, %s96
    %p105 = scmp.eq.s32.totalorder %s15, 1
    %p106 = por %p104, %p105
    %p107 = scmp.ne.s32.totalorder %s96, %s97
    %p108 = scmp.eq.s32.totalorder %s15, 0
    %p109 = por %p107, %p108
    %p110 = scmp.ne.s32.totalorder %s96, %s97
    %p111 = scmp.eq.s32.totalorder %s16, 1
    %p112 = por %p110, %p111
    %p114 = scmp.ne.s32.totalorder %s97, %s113
    %p115 = scmp.eq.s32.totalorder %s16, 0
    %p116 = por %p114, %p115
    %p117 = scmp.le.s32.totalorder 1, %s10
    %p118 = scmp.lt.s32.totalorder %s10, 3
    %p119 = pnand %p117, %p118
    %p120 = pneg %p119
    // Predicated region
    $region9: #{basic_res_block_forward.6} parent=5 // pred_check
      _
    $region10: #{basic_res_block_forward.6} parent=5 // pred_check_branch
      %122 = sbr.rel (%p119) target = $region12
    $region11: #{basic_res_block_forward.6} parent=5 // pred_region
      %s123 = ssub.s32 %s10, 1
      // Predicated region
      $region13: #{basic_res_block_forward.6} parent=11 // pred_check
        %p124 = pneg %p57
      $region14: #{basic_res_block_forward.6} parent=11 // pred_check_branch
        %126 = sbr.rel (%p124) target = $region16
      $region15: #{basic_res_block_forward.6} parent=11 // pred_region
        _
      $region16: #{basic_res_block_forward.6} parent=11 // pred_fallthru
        _
    $region12: #{basic_res_block_forward.6} parent=5 // pred_fallthru
      _
    %p127 = scmp.lt.s32.totalorder %s10, 2
    // Predicated region
    $region17: #{basic_res_block_forward.6} parent=5 // pred_check
      %p128 = pneg %p127
    $region18: #{basic_res_block_forward.6} parent=5 // pred_check_branch
      %130 = sbr.rel (%p128) target = $region20
    $region19: #{basic_res_block_forward.6} parent=5 // pred_region
      // Predicated region
      $region21: #{basic_res_block_forward.6} parent=19 // pred_check
        %p131 = pneg %p30
      $region22: #{basic_res_block_forward.6} parent=19 // pred_check_branch
        %133 = sbr.rel (%p131) target = $region24
      $region23: #{basic_res_block_forward.6} parent=19 // pred_region
        %s134 = smul.u32 8, %s10
        %p135 = scmp.lt.s32.totalorder %s134, 15
        %s136 = scalar_select %p135, %s134, 15
        %s137 = smul.addr %s136, 4
        %s138 = scalar_lea.vmem %s0, %s137
        %s139 = smul.u32 8, %s10
      $region24: #{basic_res_block_forward.6} parent=19 // pred_fallthru
        _
    $region20: #{basic_res_block_forward.6} parent=5 // pred_fallthru
      _
    %p140 = scmp.le.s32.totalorder 1, %s10
    %p141 = scmp.lt.s32.totalorder %s10, 3
    %p142 = pnand %p140, %p141
    %p143 = pneg %p142
    // Predicated region
    $region25: #{basic_res_block_forward.6} parent=5 // pred_check
      _
    $region26: #{basic_res_block_forward.6} parent=5 // pred_check_branch
      %145 = sbr.rel (%p142) target = $region28
    $region27: #{basic_res_block_forward.6} parent=5 // pred_region
      %s146 = ssub.s32 %s10, 1
      %s147 = smul.u32 8, %s15
      %p148 = scmp.lt.s32.totalorder %s147, 15
      %s149 = scalar_select %p148, %s147, 15
      %s150 = smul.addr %s149, 4
      %s151 = scalar_lea.vmem %s0, %s150
      %p152 = pneg %p36
      %p153 = pneg %p33
      %p154 = pneg %p57
      %p155 = pneg %p54
      %p156 = pneg %p83
      %p157 = pneg %p80
      %s158 = smul.u32 8, %s15
      %p159 = scmp.lt.s32.totalorder %s158, 15
      %s160 = scalar_select %p159, %s158, 15
      %s161 = smul.addr %s160, 4
      %s162 = scalar_lea.vmem %s2, %s161
      %p163 = pneg %p109
      %p164 = pneg %p106
      %p165 = scmp.lt.s32.totalorder %s15, 1
      %s166 = scalar_select %p165, %s15, 1
      %s167 = smul.addr %s166, 8
      %s168 = scalar_lea.vmem %s3, %s167
      %s169 = smul.u32 8, %s15
      %p170 = scmp.lt.s32.totalorder %s169, 15
      %s171 = scalar_select %p170, %s169, 15
      %s172 = smul.addr %s171, 4
      %s173 = scalar_lea.vmem %s0, %s172
      %s174 = smul.u32 8, %s15
      %s175 = smul.u32 8, %s15
      %p176 = scmp.lt.s32.totalorder %s175, 15
      %s177 = scalar_select %p176, %s175, 15
      %s178 = smul.addr %s177, 4
      %s179 = scalar_lea.vmem %s2, %s178
      %s180 = smul.u32 8, %s15
      %p181 = scmp.lt.s32.totalorder %s15, 1
      %s182 = scalar_select %p181, %s15, 1
      %s183 = smul.addr %s182, 8
      %s184 = scalar_lea.vmem %s3, %s183
      %v186 = vld [vmem:[%s173] sm:$0xf]
      %v187 = vld [vmem:[%s173 + $0x4] sm:$0xf]
      %v188 = vld [vmem:[%s173 + $0x8] sm:$0xf]
      %v189 = vld [vmem:[%s173 + $0xc] sm:$0xf]
      %v190 = vld [vmem:[%s173 + $0x10] sm:$0xf]
      %v191 = vld [vmem:[%s173 + $0x14] sm:$0xf]
      %v192 = vld [vmem:[%s173 + $0x18] sm:$0xf]
      %v193 = vld [vmem:[%s173 + $0x1c] sm:$0xf]
      %v194 = vld [vmem:[%s1] sm:$0xf]
      %v195 = vld [vmem:[%s1 + $0x4] sm:$0xf]
      %v196 = vld [vmem:[%s1 + $0x8] sm:$0xf]
      %v197 = vld [vmem:[%s1 + $0xc] sm:$0xf]
      %v198 = vld [vmem:[%s1 + $0x10] sm:$0xf]
      %v199 = vld [vmem:[%s1 + $0x14] sm:$0xf]
      %v200 = vld [vmem:[%s1 + $0x18] sm:$0xf]
      %v201 = vld [vmem:[%s1 + $0x1c] sm:$0xf]
      %v202 = vld [vmem:[%s1 + $0x20] sm:$0xf]
      %v211 = vunpack.c.l.b16 %v186
      %v212 = vunpack.c.l.b16 %v187
      %v213 = vunpack.c.l.b16 %v188
      %v214 = vunpack.c.l.b16 %v189
      %v215 = vunpack.c.l.b16 %v190
      %v216 = vunpack.c.l.b16 %v191
      %v217 = vunpack.c.l.b16 %v192
      %v218 = vunpack.c.l.b16 %v193
      %v219 = vpack.c.b16 %v212, %v211
      %v220 = vpack.c.b16 %v214, %v213
      %v221 = vpack.c.b16 %v216, %v215
      %v222 = vpack.c.b16 %v218, %v217
      %v232 = vunpack.c.l.b16 %v194
      %v233 = vunpack.c.l.b16 %v195
      %v234 = vunpack.c.l.b16 %v196
      %v235 = vunpack.c.l.b16 %v197
      %v236 = vunpack.c.l.b16 %v198
      %v237 = vunpack.c.l.b16 %v199
      %v238 = vunpack.c.l.b16 %v200
      %v239 = vunpack.c.l.b16 %v201
      %v240 = vunpack.c.l.b16 %v202
      %v241 = vpack.c.b16 %v233, %v232
      %v242 = vpack.c.b16 %v235, %v234
      %v243 = vpack.c.b16 %v237, %v236
      %v244 = vpack.c.b16 %v239, %v238
      %v245 = vpack.c.b16 %v240, %v240
      %vm250 = vcmask 588800
      %v252 = vsel %vm250, %v219, 0
      %v255 = vsel %vm250, %v220, 0
      %v258 = vsel %vm250, %v221, 0
      %v261 = vsel %vm250, %v222, 0
      %vm263 = vcmask 1043456
      %v265 = vsel %vm263, %v245, 0
      %267 = vmatpush.bf16.msra.mxu0 0
      %268 = vmatpush.bf16.msra.mxu0 0
      %269 = vmatpush.bf16.msra.mxu0 0
      %270 = vmatpush.bf16.msra.mxu0 %v265
      %271 = vmatpush.bf16.msra.mxu0 %v244
      %272 = vmatpush.bf16.msra.mxu0 %v243
      %273 = vmatpush.bf16.msra.mxu0 %v242
      %274 = vmatpush.bf16.msra.mxu0 %v241
      %275 = vmatmul.bf16.gmra.mxu0 %v252
      %v276 = vpop.f32.mrf.mxu0
      %v277 = vadd.f32 0.0, %v276
      %v278 = vpop.f32.mrf.mxu0
      %v279 = vadd.f32 0.0, %v278
      %280 = vmatmul.bf16.gmra.mxu0 %v255
      %v281 = vpop.f32.mrf.mxu0
      %v282 = vadd.f32 0.0, %v281
      %v283 = vpop.f32.mrf.mxu0
      %v284 = vadd.f32 0.0, %v283
      %285 = vmatmul.bf16.gmra.mxu0 %v258
      %v286 = vpop.f32.mrf.mxu0
      %v287 = vadd.f32 0.0, %v286
      %v288 = vpop.f32.mrf.mxu0
      %v289 = vadd.f32 0.0, %v288
      %290 = vmatmul.bf16.gmra.mxu0 %v261
      %v291 = vpop.f32.mrf.mxu0
      %v292 = vadd.f32 0.0, %v291
      %v293 = vpop.f32.mrf.mxu0
      %v294 = vadd.f32 0.0, %v293
      %295 = vdwg.mxu0
      %v296 = vadd.f32 %v277, %v279
      %v297 = vadd.f32 %v296, %v282
      %v298 = vadd.f32 %v297, %v284
      %v299 = vadd.f32 %v298, %v287
      %v300 = vadd.f32 %v299, %v289
      %v301 = vadd.f32 %v300, %v292
      %v302 = vadd.f32 %v301, %v294
      %v303 = vrot.slane %v302, 4
      %v304 = vadd.f32 %v302, %v303
      %v305 = vrot.slane %v304, 2
      %v306 = vadd.f32 %v304, %v305
      %v307 = vrot.slane %v306, 1
      %v308 = vadd.f32 %v306, %v307
      %v309 = vrcp.pop 64.0
      %v310 = vmul.f32 64.0, %v309
      %v311 = vsub.f32 1.0, %v310
      %v312 = vmul.f32 %v309, %v311
      %v313 = vadd.f32 %v309, %v312
      %vm314 = vweird.f32 %v309
      %v315 = vsel %vm314, %v309, %v313
      %v316 = vmul.f32 %v308, %v315
      %v317 = vsub.f32 %v277, %v316
      %v318 = vsub.f32 %v279, %v316
      %v319 = vsub.f32 %v282, %v316
      %v320 = vsub.f32 %v284, %v316
      %v321 = vsub.f32 %v287, %v316
      %v322 = vsub.f32 %v289, %v316
      %v323 = vsub.f32 %v292, %v316
      %v324 = vsub.f32 %v294, %v316
      %v325 = vmul.f32 %v317, %v317
      %v326 = vmul.f32 %v318, %v318
      %v327 = vmul.f32 %v319, %v319
      %v328 = vmul.f32 %v320, %v320
      %v329 = vmul.f32 %v321, %v321
      %v330 = vmul.f32 %v322, %v322
      %v331 = vmul.f32 %v323, %v323
      %v332 = vmul.f32 %v324, %v324
      %v333 = vadd.f32 %v325, %v326
      %v334 = vadd.f32 %v333, %v327
      %v335 = vadd.f32 %v334, %v328
      %v336 = vadd.f32 %v335, %v329
      %v337 = vadd.f32 %v336, %v330
      %v338 = vadd.f32 %v337, %v331
      %v339 = vadd.f32 %v338, %v332
      %v340 = vrot.slane %v339, 4
      %v341 = vadd.f32 %v339, %v340
      %v342 = vrot.slane %v341, 2
      %v343 = vadd.f32 %v341, %v342
      %v344 = vrot.slane %v343, 1
      %v345 = vadd.f32 %v343, %v344
      %vm346 = vcmask 1040384
      %v347 = vsel %vm346, %v308, %v345
      %vm348 = vcmask 1041408
      %v349 = vsel %vm348, %v347, 0.0
      %350 = vst [vmem:[%s184] sm:$0xff] %v349
      %v351 = vpack.c.bf16 %v277, %v277
      %v352 = vpack.c.bf16 %v279, %v279
      %v353 = vpack.c.bf16 %v282, %v282
      %v354 = vpack.c.bf16 %v284, %v284
      %v355 = vpack.c.bf16 %v287, %v287
      %v356 = vpack.c.bf16 %v289, %v289
      %v357 = vpack.c.bf16 %v292, %v292
      %v358 = vpack.c.bf16 %v294, %v294
      %359 = vst [vmem:[%s179] sm:$0xf] %v351
      %360 = vst [vmem:[%s179 + $0x4] sm:$0xf] %v352
      %361 = vst [vmem:[%s179 + $0x8] sm:$0xf] %v353
      %362 = vst [vmem:[%s179 + $0xc] sm:$0xf] %v354
      %363 = vst [vmem:[%s179 + $0x10] sm:$0xf] %v355
      %364 = vst [vmem:[%s179 + $0x14] sm:$0xf] %v356
      %365 = vst [vmem:[%s179 + $0x18] sm:$0xf] %v357
      %366 = vst [vmem:[%s179 + $0x1c] sm:$0xf] %v358
      %s367 = smul.u32 8, %s15
      %p368 = scmp.lt.s32.totalorder %s367, 15
      %s369 = scalar_select %p368, %s367, 15
      %s370 = smul.addr %s369, 4
      %s371 = scalar_lea.vmem %s2, %s370
      %p372 = scmp.lt.s32.totalorder %s15, 1
      %s373 = scalar_select %p372, %s15, 1
      %s374 = smul.addr %s373, 8
      %s375 = scalar_lea.vmem %s3, %s374
      // Predicated region
      $region29: #{basic_res_block_forward.6} parent=27 // pred_check
        %p376 = pneg %p80
      $region30: #{basic_res_block_forward.6} parent=27 // pred_check_branch
        %378 = sbr.rel (%p376) target = $region32
      $region31: #{basic_res_block_forward.6} parent=27 // pred_region
        %s379 = smul.u32 8, %s15
      $region32: #{basic_res_block_forward.6} parent=27 // pred_fallthru
        _
      // Predicated region
      $region33: #{basic_res_block_forward.6} parent=27 // pred_check
        %p380 = pneg %p106
      $region34: #{basic_res_block_forward.6} parent=27 // pred_check_branch
        %382 = sbr.rel (%p380) target = $region36
      $region35: #{basic_res_block_forward.6} parent=27 // pred_region
        _
      $region36: #{basic_res_block_forward.6} parent=27 // pred_fallthru
        _
    $region28: #{basic_res_block_forward.6} parent=5 // pred_fallthru
      _
    %p383 = scmp.le.s32.totalorder 2, %s10
    // Predicated region
    $region37: #{basic_res_block_forward.6} parent=5 // pred_check
      %p384 = pneg %p383
    $region38: #{basic_res_block_forward.6} parent=5 // pred_check_branch
      %386 = sbr.rel (%p384) target = $region40
    $region39: #{basic_res_block_forward.6} parent=5 // pred_region
      %s387 = ssub.s32 %s10, 2
      // Predicated region
      $region41: #{basic_res_block_forward.6} parent=39 // pred_check
        %p388 = pneg %p86
      $region42: #{basic_res_block_forward.6} parent=39 // pred_check_branch
        %390 = sbr.rel (%p388) target = $region44
      $region43: #{basic_res_block_forward.6} parent=39 // pred_region
        %s391 = smul.u32 8, %s16
        %p392 = scmp.lt.s32.totalorder %s391, 15
        %s393 = scalar_select %p392, %s391, 15
        %s394 = smul.addr %s393, 4
        %s395 = scalar_lea.vmem %s2, %s394
      $region44: #{basic_res_block_forward.6} parent=39 // pred_fallthru
        _
      // Predicated region
      $region45: #{basic_res_block_forward.6} parent=39 // pred_check
        %p396 = pneg %p112
      $region46: #{basic_res_block_forward.6} parent=39 // pred_check_branch
        %398 = sbr.rel (%p396) target = $region48
      $region47: #{basic_res_block_forward.6} parent=39 // pred_region
        %p399 = scmp.lt.s32.totalorder %s16, 1
        %s400 = scalar_select %p399, %s16, 1
        %s401 = smul.addr %s400, 8
        %s402 = scalar_lea.vmem %s3, %s401
      $region48: #{basic_res_block_forward.6} parent=39 // pred_fallthru
        _
    $region40: #{basic_res_block_forward.6} parent=5 // pred_fallthru
      _
  $region6: #{basic_res_block_forward.6} parent=0 // loop_footer
    %s14 = sadd.s32 1, %s10
  $region7: #{basic_res_block_forward.6} parent=0 // loop_footer_branch
    %9 = sbr.rel target = $region3
  $region8: #{basic_res_block_forward.6} parent=0 // loop_exit
    _

// kernel: basic_res_block_forward.7
$region0: #{basic_res_block_forward.7}
  #allocation0 [shape = 'u32[]', space=smem, size = 0x4, offset = 0x4, fixed_abs, tag = 'smem constant byte address 0x4 - core index']
  #allocation1 [shape = 'u32[72,128]{1,0:T(1,128)}', space=vmem, size = 0x9000, scoped, tag = 'internal scratch']
  %s0 = inlined_call_operand.vmem [shape: bf16[128,128], index: 0, kind: input, shape index: {}]
  %s1 = inlined_call_operand.vmem [shape: f32[1,128], index: 1, kind: input, shape index: {}]
  %s2 = inlined_call_operand.vmem [shape: f32[1,128], index: 2, kind: input, shape index: {}]
  %s3 = inlined_call_operand.vmem [shape: bf16[128,128], index: 3, kind: input, shape index: {}]
  %s4 = inlined_call_operand.vmem [shape: f32[1,128], index: 4, kind: input, shape index: {}]
  %s5 = inlined_call_operand.vmem [shape: f32[1,128], index: 5, kind: input, shape index: {}]
  %s6 = inlined_call_operand.vmem [shape: f32[128,128], index: 6, kind: output, shape index: {}]
  %s7 = sld [smem:[#allocation0]]
  $region57: #{basic_res_block_forward.7} parent=0
    _
  %s9 = ssub.s32 1, %s7
  %s10 = scalar_select 0, %s9, %s7
  loop: start=0, step=1, limit=4
  $region2: #{basic_res_block_forward.7} parent=0 // loop_pre_header
    _
  $region3: #{basic_res_block_forward.7} parent=0 // loop_header
    %s12 = sphi 0, %s16
    %p13 = scmp.ge.s32.totalorder %s12, 4
    %s22 = sphi 0, %s24
    %s25 = sphi 0, %s22
    %s26 = sphi 0, %s25
    %s42 = sphi 0, %s26
    %s46 = sphi 0, %s46
    %s48 = sphi 0, %s46
    %s49 = sphi 0, %s48
    %s63 = sphi 0, %s49
    %s67 = sphi 0, %s67
    %s69 = sphi 0, %s67
    %s70 = sphi 0, %s69
    %s84 = sphi 0, %s70
    %s90 = sphi 0, %s92
    %s93 = sphi 0, %s90
    %s94 = sphi 0, %s93
    %s110 = sphi 0, %s94
    %s114 = sphi 0, %s114
    %s116 = sphi 0, %s114
    %s117 = sphi 0, %s116
    %s131 = sphi 0, %s117
    %s135 = sphi 0, %s135
    %s137 = sphi 0, %s135
    %s138 = sphi 0, %s137
    %s152 = sphi 0, %s138
    %s158 = sphi 0, %s160
    %s161 = sphi 0, %s158
    %s162 = sphi 0, %s161
    %s178 = sphi 0, %s162
  $region4: #{basic_res_block_forward.7} parent=0 // loop_header_branch
    %15 = sbr.rel (%p13) target = $region8
  $region5: #{basic_res_block_forward.7} parent=0 // loop_body
    %s17 = ssub.s32 %s12, 1
    %s18 = ssub.s32 %s12, 2
    %s19 = sadd.s32 %s12, 1
    %s20 = ssub.s32 %s12, %s19
    %p21 = scmp.eq.s32.totalorder %s20, 0
    %s23 = sadd.s32 %s22, 1
    %s24 = scalar_select %p21, %s22, %s23
    %p27 = pneg %p21
    %p28 = scmp.eq.s32.totalorder %s12, 1
    %p29 = por %p27, %p28
    %p30 = scmp.ne.s32.totalorder %s22, %s25
    %p31 = scmp.eq.s32.totalorder %s12, 0
    %p32 = por %p30, %p31
    %p33 = scmp.ne.s32.totalorder %s22, %s25
    %p34 = scmp.eq.s32.totalorder %s17, 1
    %p35 = por %p33, %p34
    %p36 = scmp.ne.s32.totalorder %s25, %s26
    %p37 = scmp.eq.s32.totalorder %s17, 0
    %p38 = por %p36, %p37
    %p39 = scmp.ne.s32.totalorder %s25, %s26
    %p40 = scmp.eq.s32.totalorder %s18, 1
    %p41 = por %p39, %p40
    %p43 = scmp.ne.s32.totalorder %s26, %s42
    %p44 = scmp.eq.s32.totalorder %s18, 0
    %p45 = por %p43, %p44
    %s47 = sadd.s32 %s46, 1
    %p50 = scmp.eq.s32.totalorder %s12, 1
    %p51 = scmp.ne.s32.totalorder %s46, %s48
    %p52 = scmp.eq.s32.totalorder %s12, 0
    %p53 = por %p51, %p52
    %p54 = scmp.ne.s32.totalorder %s46, %s48
    %p55 = scmp.eq.s32.totalorder %s17, 1
    %p56 = por %p54, %p55
    %p57 = scmp.ne.s32.totalorder %s48, %s49
    %p58 = scmp.eq.s32.totalorder %s17, 0
    %p59 = por %p57, %p58
    %p60 = scmp.ne.s32.totalorder %s48, %s49
    %p61 = scmp.eq.s32.totalorder %s18, 1
    %p62 = por %p60, %p61
    %p64 = scmp.ne.s32.totalorder %s49, %s63
    %p65 = scmp.eq.s32.totalorder %s18, 0
    %p66 = por %p64, %p65
    %s68 = sadd.s32 %s67, 1
    %p71 = scmp.eq.s32.totalorder %s12, 1
    %p72 = scmp.ne.s32.totalorder %s67, %s69
    %p73 = scmp.eq.s32.totalorder %s12, 0
    %p74 = por %p72, %p73
    %p75 = scmp.ne.s32.totalorder %s67, %s69
    %p76 = scmp.eq.s32.totalorder %s17, 1
    %p77 = por %p75, %p76
    %p78 = scmp.ne.s32.totalorder %s69, %s70
    %p79 = scmp.eq.s32.totalorder %s17, 0
    %p80 = por %p78, %p79
    %p81 = scmp.ne.s32.totalorder %s69, %s70
    %p82 = scmp.eq.s32.totalorder %s18, 1
    %p83 = por %p81, %p82
    %p85 = scmp.ne.s32.totalorder %s70, %s84
    %p86 = scmp.eq.s32.totalorder %s18, 0
    %p87 = por %p85, %p86
    %s88 = ssub.s32 %s12, %s19
    %p89 = scmp.eq.s32.totalorder %s88, 0
    %s91 = sadd.s32 %s90, 1
    %s92 = scalar_select %p89, %s90, %s91
    %p95 = pneg %p89
    %p96 = scmp.eq.s32.totalorder %s12, 1
    %p97 = por %p95, %p96
    %p98 = scmp.ne.s32.totalorder %s90, %s93
    %p99 = scmp.eq.s32.totalorder %s12, 0
    %p100 = por %p98, %p99
    %p101 = scmp.ne.s32.totalorder %s90, %s93
    %p102 = scmp.eq.s32.totalorder %s17, 1
    %p103 = por %p101, %p102
    %p104 = scmp.ne.s32.totalorder %s93, %s94
    %p105 = scmp.eq.s32.totalorder %s17, 0
    %p106 = por %p104, %p105
    %p107 = scmp.ne.s32.totalorder %s93, %s94
    %p108 = scmp.eq.s32.totalorder %s18, 1
    %p109 = por %p107, %p108
    %p111 = scmp.ne.s32.totalorder %s94, %s110
    %p112 = scmp.eq.s32.totalorder %s18, 0
    %p113 = por %p111, %p112
    %s115 = sadd.s32 %s114, 1
    %p118 = scmp.eq.s32.totalorder %s12, 1
    %p119 = scmp.ne.s32.totalorder %s114, %s116
    %p120 = scmp.eq.s32.totalorder %s12, 0
    %p121 = por %p119, %p120
    %p122 = scmp.ne.s32.totalorder %s114, %s116
    %p123 = scmp.eq.s32.totalorder %s17, 1
    %p124 = por %p122, %p123
    %p125 = scmp.ne.s32.totalorder %s116, %s117
    %p126 = scmp.eq.s32.totalorder %s17, 0
    %p127 = por %p125, %p126
    %p128 = scmp.ne.s32.totalorder %s116, %s117
    %p129 = scmp.eq.s32.totalorder %s18, 1
    %p130 = por %p128, %p129
    %p132 = scmp.ne.s32.totalorder %s117, %s131
    %p133 = scmp.eq.s32.totalorder %s18, 0
    %p134 = por %p132, %p133
    %s136 = sadd.s32 %s135, 1
    %p139 = scmp.eq.s32.totalorder %s12, 1
    %p140 = scmp.ne.s32.totalorder %s135, %s137
    %p141 = scmp.eq.s32.totalorder %s12, 0
    %p142 = por %p140, %p141
    %p143 = scmp.ne.s32.totalorder %s135, %s137
    %p144 = scmp.eq.s32.totalorder %s17, 1
    %p145 = por %p143, %p144
    %p146 = scmp.ne.s32.totalorder %s137, %s138
    %p147 = scmp.eq.s32.totalorder %s17, 0
    %p148 = por %p146, %p147
    %p149 = scmp.ne.s32.totalorder %s137, %s138
    %p150 = scmp.eq.s32.totalorder %s18, 1
    %p151 = por %p149, %p150
    %p153 = scmp.ne.s32.totalorder %s138, %s152
    %p154 = scmp.eq.s32.totalorder %s18, 0
    %p155 = por %p153, %p154
    %s156 = ssub.s32 %s12, %s19
    %p157 = scmp.eq.s32.totalorder %s156, 0
    %s159 = sadd.s32 %s158, 1
    %s160 = scalar_select %p157, %s158, %s159
    %p163 = pneg %p157
    %p164 = scmp.eq.s32.totalorder %s12, 1
    %p165 = por %p163, %p164
    %p166 = scmp.ne.s32.totalorder %s158, %s161
    %p167 = scmp.eq.s32.totalorder %s12, 0
    %p168 = por %p166, %p167
    %p169 = scmp.ne.s32.totalorder %s158, %s161
    %p170 = scmp.eq.s32.totalorder %s17, 1
    %p171 = por %p169, %p170
    %p172 = scmp.ne.s32.totalorder %s161, %s162
    %p173 = scmp.eq.s32.totalorder %s17, 0
    %p174 = por %p172, %p173
    %p175 = scmp.ne.s32.totalorder %s161, %s162
    %p176 = scmp.eq.s32.totalorder %s18, 1
    %p177 = por %p175, %p176
    %p179 = scmp.ne.s32.totalorder %s162, %s178
    %p180 = scmp.eq.s32.totalorder %s18, 0
    %p181 = por %p179, %p180
    %p182 = scmp.le.s32.totalorder 1, %s12
    %p183 = scmp.lt.s32.totalorder %s12, 3
    %p184 = pnand %p182, %p183
    %p185 = pneg %p184
    // Predicated region
    $region9: #{basic_res_block_forward.7} parent=5 // pred_check
      _
    $region10: #{basic_res_block_forward.7} parent=5 // pred_check_branch
      %187 = sbr.rel (%p184) target = $region12
    $region11: #{basic_res_block_forward.7} parent=5 // pred_region
      %s188 = ssub.s32 %s12, 1
      // Predicated region
      $region13: #{basic_res_block_forward.7} parent=11 // pred_check
        %p189 = pneg %p59
      $region14: #{basic_res_block_forward.7} parent=11 // pred_check_branch
        %191 = sbr.rel (%p189) target = $region16
      $region15: #{basic_res_block_forward.7} parent=11 // pred_region
        _
      $region16: #{basic_res_block_forward.7} parent=11 // pred_fallthru
        _
      // Predicated region
      $region17: #{basic_res_block_forward.7} parent=11 // pred_check
        %p192 = pneg %p80
      $region18: #{basic_res_block_forward.7} parent=11 // pred_check_branch
        %194 = sbr.rel (%p192) target = $region20
      $region19: #{basic_res_block_forward.7} parent=11 // pred_region
        _
      $region20: #{basic_res_block_forward.7} parent=11 // pred_fallthru
        _
      // Predicated region
      $region21: #{basic_res_block_forward.7} parent=11 // pred_check
        %p195 = pneg %p127
      $region22: #{basic_res_block_forward.7} parent=11 // pred_check_branch
        %197 = sbr.rel (%p195) target = $region24
      $region23: #{basic_res_block_forward.7} parent=11 // pred_region
        _
      $region24: #{basic_res_block_forward.7} parent=11 // pred_fallthru
        _
      // Predicated region
      $region25: #{basic_res_block_forward.7} parent=11 // pred_check
        %p198 = pneg %p148
      $region26: #{basic_res_block_forward.7} parent=11 // pred_check_branch
        %200 = sbr.rel (%p198) target = $region28
      $region27: #{basic_res_block_forward.7} parent=11 // pred_region
        _
      $region28: #{basic_res_block_forward.7} parent=11 // pred_fallthru
        _
    $region12: #{basic_res_block_forward.7} parent=5 // pred_fallthru
      _
    %p201 = scmp.lt.s32.totalorder %s12, 2
    // Predicated region
    $region29: #{basic_res_block_forward.7} parent=5 // pred_check
      %p202 = pneg %p201
    $region30: #{basic_res_block_forward.7} parent=5 // pred_check_branch
      %204 = sbr.rel (%p202) target = $region32
    $region31: #{basic_res_block_forward.7} parent=5 // pred_region
      // Predicated region
      $region33: #{basic_res_block_forward.7} parent=31 // pred_check
        %p205 = pneg %p32
      $region34: #{basic_res_block_forward.7} parent=31 // pred_check_branch
        %207 = sbr.rel (%p205) target = $region36
      $region35: #{basic_res_block_forward.7} parent=31 // pred_region
        %s208 = smul.u32 8, %s12
        %p209 = scmp.lt.s32.totalorder %s208, 15
        %s210 = scalar_select %p209, %s208, 15
        %s211 = smul.addr %s210, 4
        %s212 = scalar_lea.vmem %s0, %s211
        %s213 = smul.u32 8, %s12
      $region36: #{basic_res_block_forward.7} parent=31 // pred_fallthru
        _
      // Predicated region
      $region37: #{basic_res_block_forward.7} parent=31 // pred_check
        %p214 = pneg %p100
      $region38: #{basic_res_block_forward.7} parent=31 // pred_check_branch
        %216 = sbr.rel (%p214) target = $region40
      $region39: #{basic_res_block_forward.7} parent=31 // pred_region
        %s217 = smul.u32 8, %s12
        %p218 = scmp.lt.s32.totalorder %s217, 15
        %s219 = scalar_select %p218, %s217, 15
        %s220 = smul.addr %s219, 4
        %s221 = scalar_lea.vmem %s3, %s220
        %s222 = smul.u32 8, %s12
      $region40: #{basic_res_block_forward.7} parent=31 // pred_fallthru
        _
    $region32: #{basic_res_block_forward.7} parent=5 // pred_fallthru
      _
    %p223 = scmp.le.s32.totalorder 1, %s12
    %p224 = scmp.lt.s32.totalorder %s12, 3
    %p225 = pnand %p223, %p224
    %p226 = pneg %p225
    // Predicated region
    $region41: #{basic_res_block_forward.7} parent=5 // pred_check
      _
    $region42: #{basic_res_block_forward.7} parent=5 // pred_check_branch
      %228 = sbr.rel (%p225) target = $region44
    $region43: #{basic_res_block_forward.7} parent=5 // pred_region
      %s229 = ssub.s32 %s12, 1
      %s230 = smul.u32 8, %s17
      %p231 = scmp.lt.s32.totalorder %s230, 15
      %s232 = scalar_select %p231, %s230, 15
      %s233 = smul.addr %s232, 4
      %s234 = scalar_lea.vmem %s0, %s233
      %p235 = pneg %p38
      %p236 = pneg %p35
      %p237 = pneg %p59
      %p238 = pneg %p56
      %p239 = pneg %p80
      %p240 = pneg %p77
      %s241 = smul.u32 8, %s17
      %p242 = scmp.lt.s32.totalorder %s241, 15
      %s243 = scalar_select %p242, %s241, 15
      %s244 = smul.addr %s243, 4
      %s245 = scalar_lea.vmem %s3, %s244
      %p246 = pneg %p106
      %p247 = pneg %p103
      %p248 = pneg %p127
      %p249 = pneg %p124
      %p250 = pneg %p148
      %p251 = pneg %p145
      %p252 = pneg %p174
      %p253 = pneg %p171
      %s254 = smul.u32 8, %s17
      %p255 = scmp.lt.s32.totalorder %s254, 15
      %s256 = scalar_select %p255, %s254, 15
      %s257 = smul.addr %s256, 8
      %s258 = scalar_lea.vmem %s6, %s257
      %s259 = smul.u32 8, %s17
      %p260 = scmp.lt.s32.totalorder %s259, 15
      %s261 = scalar_select %p260, %s259, 15
      %s262 = smul.addr %s261, 4
      %s263 = scalar_lea.vmem %s0, %s262
      %s264 = smul.u32 8, %s17
      %s265 = smul.u32 8, %s17
      %p266 = scmp.lt.s32.totalorder %s265, 15
      %s267 = scalar_select %p266, %s265, 15
      %s268 = smul.addr %s267, 4
      %s269 = scalar_lea.vmem %s3, %s268
      %s270 = smul.u32 8, %s17
      %s271 = smul.u32 8, %s17
      %p272 = scmp.lt.s32.totalorder %s271, 15
      %s273 = scalar_select %p272, %s271, 15
      %s274 = smul.addr %s273, 8
      %s275 = scalar_lea.vmem %s6, %s274
      %s276 = smul.u32 8, %s17
      %v277 = vld [vmem:[%s263] sm:$0xf]
      %v278 = vld [vmem:[%s263 + $0x4] sm:$0xf]
      %v279 = vld [vmem:[%s263 + $0x8] sm:$0xf]
      %v280 = vld [vmem:[%s263 + $0xc] sm:$0xf]
      %v281 = vld [vmem:[%s263 + $0x10] sm:$0xf]
      %v282 = vld [vmem:[%s263 + $0x14] sm:$0xf]
      %v283 = vld [vmem:[%s263 + $0x18] sm:$0xf]
      %v284 = vld [vmem:[%s263 + $0x1c] sm:$0xf]
      %v285 = vunpack.c.l.bf16 %v277
      %v286 = vunpack.c.l.bf16 %v278
      %v287 = vunpack.c.l.bf16 %v279
      %v288 = vunpack.c.l.bf16 %v280
      %v289 = vunpack.c.l.bf16 %v281
      %v290 = vunpack.c.l.bf16 %v282
      %v291 = vunpack.c.l.bf16 %v283
      %v292 = vunpack.c.l.bf16 %v284
      %v293 = vld [vmem:[%s1] sm:$0x1]
      %v295 = vperm.slane %v293, 0
      %v297 = vmul.f32 %v285, %v295
      %v298 = vmul.f32 %v286, %v295
      %v299 = vmul.f32 %v287, %v295
      %v300 = vmul.f32 %v288, %v295
      %v301 = vmul.f32 %v289, %v295
      %v302 = vmul.f32 %v290, %v295
      %v303 = vmul.f32 %v291, %v295
      %v304 = vmul.f32 %v292, %v295
      %v305 = vld [vmem:[%s2] sm:$0x1]
      %v307 = vperm.slane %v305, 0
      %v309 = vadd.f32 %v297, %v307
      %v310 = vadd.f32 %v298, %v307
      %v311 = vadd.f32 %v299, %v307
      %v312 = vadd.f32 %v300, %v307
      %v313 = vadd.f32 %v301, %v307
      %v314 = vadd.f32 %v302, %v307
      %v315 = vadd.f32 %v303, %v307
      %v316 = vadd.f32 %v304, %v307
      %v317 = vld [vmem:[%s269] sm:$0xf]
      %v318 = vld [vmem:[%s269 + $0x4] sm:$0xf]
      %v319 = vld [vmem:[%s269 + $0x8] sm:$0xf]
      %v320 = vld [vmem:[%s269 + $0xc] sm:$0xf]
      %v321 = vld [vmem:[%s269 + $0x10] sm:$0xf]
      %v322 = vld [vmem:[%s269 + $0x14] sm:$0xf]
      %v323 = vld [vmem:[%s269 + $0x18] sm:$0xf]
      %v324 = vld [vmem:[%s269 + $0x1c] sm:$0xf]
      %v325 = vunpack.c.l.bf16 %v317
      %v326 = vunpack.c.l.bf16 %v318
      %v327 = vunpack.c.l.bf16 %v319
      %v328 = vunpack.c.l.bf16 %v320
      %v329 = vunpack.c.l.bf16 %v321
      %v330 = vunpack.c.l.bf16 %v322
      %v331 = vunpack.c.l.bf16 %v323
      %v332 = vunpack.c.l.bf16 %v324
      %v333 = vld [vmem:[%s4] sm:$0x1]
      %v335 = vperm.slane %v333, 0
      %v337 = vmul.f32 %v325, %v335
      %v338 = vmul.f32 %v326, %v335
      %v339 = vmul.f32 %v327, %v335
      %v340 = vmul.f32 %v328, %v335
      %v341 = vmul.f32 %v329, %v335
      %v342 = vmul.f32 %v330, %v335
      %v343 = vmul.f32 %v331, %v335
      %v344 = vmul.f32 %v332, %v335
      %v345 = vld [vmem:[%s5] sm:$0x1]
      %v347 = vperm.slane %v345, 0
      %v349 = vadd.f32 %v337, %v347
      %v350 = vadd.f32 %v338, %v347
      %v351 = vadd.f32 %v339, %v347
      %v352 = vadd.f32 %v340, %v347
      %v353 = vadd.f32 %v341, %v347
      %v354 = vadd.f32 %v342, %v347
      %v355 = vadd.f32 %v343, %v347
      %v356 = vadd.f32 %v344, %v347
      %v357 = vadd.f32 %v309, %v349
      %v358 = vadd.f32 %v310, %v350
      %v359 = vadd.f32 %v311, %v351
      %v360 = vadd.f32 %v312, %v352
      %v361 = vadd.f32 %v313, %v353
      %v362 = vadd.f32 %v314, %v354
      %v363 = vadd.f32 %v315, %v355
      %v364 = vadd.f32 %v316, %v356
      %v365 = vmax.f32 %v357, 0.0
      %v366 = vmax.f32 %v358, 0.0
      %v367 = vmax.f32 %v359, 0.0
      %v368 = vmax.f32 %v360, 0.0
      %v369 = vmax.f32 %v361, 0.0
      %v370 = vmax.f32 %v362, 0.0
      %v371 = vmax.f32 %v363, 0.0
      %v372 = vmax.f32 %v364, 0.0
      %373 = vst [vmem:[%s275] sm:$0xff] %v365
      %374 = vst [vmem:[%s275 + $0x8] sm:$0xff] %v366
      %375 = vst [vmem:[%s275 + $0x10] sm:$0xff] %v367
      %376 = vst [vmem:[%s275 + $0x18] sm:$0xff] %v368
      %377 = vst [vmem:[%s275 + $0x20] sm:$0xff] %v369
      %378 = vst [vmem:[%s275 + $0x28] sm:$0xff] %v370
      %379 = vst [vmem:[%s275 + $0x30] sm:$0xff] %v371
      %380 = vst [vmem:[%s275 + $0x38] sm:$0xff] %v372
      %s381 = smul.u32 8, %s17
      %p382 = scmp.lt.s32.totalorder %s381, 15
      %s383 = scalar_select %p382, %s381, 15
      %s384 = smul.addr %s383, 8
      %s385 = scalar_lea.vmem %s6, %s384
      // Predicated region
      $region45: #{basic_res_block_forward.7} parent=43 // pred_check
        %p386 = pneg %p171
      $region46: #{basic_res_block_forward.7} parent=43 // pred_check_branch
        %388 = sbr.rel (%p386) target = $region48
      $region47: #{basic_res_block_forward.7} parent=43 // pred_region
        %s389 = smul.u32 8, %s17
      $region48: #{basic_res_block_forward.7} parent=43 // pred_fallthru
        _
    $region44: #{basic_res_block_forward.7} parent=5 // pred_fallthru
      _
    %p390 = scmp.le.s32.totalorder 2, %s12
    // Predicated region
    $region49: #{basic_res_block_forward.7} parent=5 // pred_check
      %p391 = pneg %p390
    $region50: #{basic_res_block_forward.7} parent=5 // pred_check_branch
      %393 = sbr.rel (%p391) target = $region52
    $region51: #{basic_res_block_forward.7} parent=5 // pred_region
      %s394 = ssub.s32 %s12, 2
      // Predicated region
      $region53: #{basic_res_block_forward.7} parent=51 // pred_check
        %p395 = pneg %p177
      $region54: #{basic_res_block_forward.7} parent=51 // pred_check_branch
        %397 = sbr.rel (%p395) target = $region56
      $region55: #{basic_res_block_forward.7} parent=51 // pred_region
        %s398 = smul.u32 8, %s18
        %p399 = scmp.lt.s32.totalorder %s398, 15
        %s400 = scalar_select %p399, %s398, 15
        %s401 = smul.addr %s400, 8
        %s402 = scalar_lea.vmem %s6, %s401
      $region56: #{basic_res_block_forward.7} parent=51 // pred_fallthru
        _
    $region52: #{basic_res_block_forward.7} parent=5 // pred_fallthru
      _
  $region6: #{basic_res_block_forward.7} parent=0 // loop_footer
    %s16 = sadd.s32 1, %s12
  $region7: #{basic_res_block_forward.7} parent=0 // loop_footer_branch
    %11 = sbr.rel target = $region3
  $region8: #{basic_res_block_forward.7} parent=0 // loop_exit
    _

</llo_original>
